<compile_context>
chip_gen: v5e
topology: v5e:2x2
jax: 0.10.0
libtpu: 0.0.40
codegen_flags: <defaults>
</compile_context>

<pallas_src>
import functools

import jax
import jax.numpy as jnp
from jax import lax
from jax.experimental import pallas as pl
from jax.experimental.pallas import tpu as pltpu


LANE = 128            # TPU lane width: feature dims padded to this inside the kernel
MAX_BATCH_TILE = 256  # cap rows/tile: keeps x + dot result + GELU temps within vregs

_GELU_C = 0.7978845608028654        # sqrt(2/pi)
_GELU_C3 = _GELU_C * 0.044715       # folded: c * 0.044715


def _round_up(n, m):
    return ((n + m - 1) // m) * m


def _fused_mlp_kernel(x_ref, w_ref, b_ref, out_ref, xbuf, *, residual_flags):
    """Fused stack: for each layer l, y = GELU(x @ W_l + b_l); x = x + y if residual.

    x_ref  : (TM, in_f)  natural-shape activation tile (any dtype)
    w_ref  : (L, P, P)   padded, pre-transposed weights (zero outside true in/out)
    b_ref  : (L, 1, P)   padded biases, f32
    out_ref: (TM, out_f) natural-shape output tile
    xbuf   : (TM, P)     f32 VMEM scratch used to build the lane-dense padded activation
    """
    in_f = x_ref.shape[-1]
    out_f = out_ref.shape[-1]

    # Build the padded activation tile in-kernel; padded lanes must be exactly zero so
    # they stay zero through matmul/bias/GELU/residual (0 * garbage would be unsafe).
    xbuf[...] = jnp.zeros_like(xbuf)
    xbuf[:, :in_f] = x_ref[...].astype(xbuf.dtype)
    x = xbuf[...]                                   # (TM, P) f32, lives in vregs/VMEM

    mm_dtype = w_ref.dtype
    prec = lax.Precision.HIGHEST if mm_dtype == jnp.float32 else None

    for l, add_res in enumerate(residual_flags):    # static unroll over layers
        w = w_ref[l]                                # (P, P) static slice, VMEM-resident
        b = b_ref[l]                                # (1, P) f32
        y = jnp.dot(x.astype(mm_dtype), w,
                    preferred_element_type=jnp.float32,
                    precision=prec) + b             # MXU, f32 accumulate + bias
        # tanh-approx GELU, constants folded: c*(y + 0.044715*y^3) = y*(c + c3*y*y)
        t = y * (_GELU_C + _GELU_C3 * (y * y))      # VALU
        g = 0.5 * y * (1.0 + jnp.tanh(t))           # tanh on the EUP slot
        x = x + g if add_res else g                 # static residual decision
    # Single store at the natural output width (masked if out_f < 128) - no wrapper slice.
    out_ref[...] = x[:, :out_f].astype(out_ref.dtype)


def prepare_fused_params(params, use_shortcut, *, lane=LANE, matmul_dtype=jnp.float32):
    """One-time prep: transpose, zero-pad to a lane-square slab, stack all layers.

    params: list of (W, b) with W of shape (out, in) like nn.Linear, b of shape (out,).
    Returns (w_stack (L,P,P) in matmul_dtype, b_stack (L,1,P) f32, residual_flags).
    """
    sizes = [params[0][0].shape[1]] + [w.shape[0] for (w, _) in params]
    P = _round_up(max(sizes), lane)
    L = len(params)
    w_stack = jnp.zeros((L, P, P), jnp.float32)
    b_stack = jnp.zeros((L, 1, P), jnp.float32)
    residual_flags = []
    for l, (w, b) in enumerate(params):
        out_f, in_f = w.shape
        w_stack = w_stack.at[l, :in_f, :out_f].set(jnp.transpose(w).astype(jnp.float32))
        b_stack = b_stack.at[l, 0, :out_f].set(b.astype(jnp.float32))
        residual_flags.append(bool(use_shortcut and in_f == out_f))
    return w_stack.astype(matmul_dtype), b_stack, tuple(residual_flags)


@functools.partial(jax.jit, static_argnames=("residual_flags", "out_features"))
def ex_residual_connections(x, w_stack, b_stack, *, residual_flags, out_features):
    """Forward pass of EXResidualConnections as one fused Pallas kernel."""
    B, in_f = x.shape
    L, P, _ = w_stack.shape

    # Batch tile / parallel grid axis: lets v7x's 2nd TensorCore pick up tiles once B
    # is non-trivial; capped to keep the EUP-bound GELU path out of vreg spill.
    TM = B if B <= MAX_BATCH_TILE else MAX_BATCH_TILE
    grid = (pl.cdiv(B, TM),)

    w_bytes = jnp.dtype(w_stack.dtype).itemsize
    cost = pl.CostEstimate(
        flops=2 * B * P * P * L,
        transcendentals=B * P * L,
        bytes_accessed=(L * P * P + L * P) * w_bytes
        + (B * in_f + B * out_features) * 4,
    )

    kernel = functools.partial(_fused_mlp_kernel, residual_flags=residual_flags)
    return pl.pallas_call(
        kernel,
        out_shape=jax.ShapeDtypeStruct((B, out_features), x.dtype),
        grid=grid,
        in_specs=[
            pl.BlockSpec((TM, in_f), lambda i: (i, 0)),    # natural-shape activation tile
            pl.BlockSpec((L, P, P), lambda i: (0, 0, 0)),  # full weight stack, resident
            pl.BlockSpec((L, 1, P), lambda i: (0, 0, 0)),  # all biases
        ],
        out_specs=pl.BlockSpec((TM, out_features), lambda i: (i, 0)),
        scratch_shapes=[pltpu.VMEM((TM, P), jnp.float32)],
        compiler_params=pltpu.CompilerParams(dimension_semantics=("parallel",)),
        cost_estimate=cost,
    )(x, w_stack, b_stack)


def _init_params(key, layer_sizes):
    """Deterministic nn.Linear-style init (uniform(-1/sqrt(in), 1/sqrt(in)))."""
    params = []
    for i in range(len(layer_sizes) - 1):
        fan_in, fan_out = layer_sizes[i], layer_sizes[i + 1]
        key, kw, kb = jax.random.split(key, 3)
        bound = 1.0 / jnp.sqrt(jnp.float32(fan_in))
        w = jax.random.uniform(kw, (fan_out, fan_in), jnp.float32, -bound, bound)
        b = jax.random.uniform(kb, (fan_out,), jnp.float32, -bound, bound)
        params.append((w, b))
    return params


def _reference(x, params, use_shortcut):
    """Plain-JAX reference (same tanh-GELU math) for correctness checks."""
    c = jnp.sqrt(jnp.float32(2.0) / jnp.float32(jnp.pi))
    h = x
    for (w, b) in params:
        y = jnp.dot(h, w.T, precision=lax.Precision.HIGHEST) + b
        g = 0.5 * y * (1.0 + jnp.tanh(c * (y + 0.044715 * (y * y * y))))
        h = h + g if (use_shortcut and h.shape == g.shape) else g
    return h


if __name__ == "__main__":
    key = jax.random.PRNGKey(0)
    layer_sizes = [32, 32, 32, 32, 16]   # residual applies where in == out
    use_shortcut = True
    batch = 8

    kx, kp = jax.random.split(key)
    x = jax.random.normal(kx, (batch, layer_sizes[0]), jnp.float32)
    params = _init_params(kp, layer_sizes)
    ref = _reference(x, params, use_shortcut)

    # f32 MXU operands (precision=HIGHEST in-kernel) -> matches the reference tightly.
    w32, b32, flags = prepare_fused_params(params, use_shortcut, matmul_dtype=jnp.float32)
    out32 = ex_residual_connections(
        x, w32, b32, residual_flags=flags, out_features=layer_sizes[-1])
    jax.block_until_ready(out32)
    assert out32.shape == (batch, layer_sizes[-1])
    err32 = float(jnp.max(jnp.abs(out32 - ref)))
    assert jnp.allclose(out32, ref, atol=1e-3, rtol=1e-3), err32

    # bf16 MXU operands (native v6e/v7x MXU path); f32 accumulate + f32 GELU/residual.
    wbf, bbf, flags_bf = prepare_fused_params(params, use_shortcut, matmul_dtype=jnp.bfloat16)
    outbf = ex_residual_connections(
        x, wbf, bbf, residual_flags=flags_bf, out_features=layer_sizes[-1])
    jax.block_until_ready(outbf)
    errbf = float(jnp.max(jnp.abs(outbf - ref)))
    assert jnp.allclose(outbf, ref, atol=5e-2, rtol=5e-2), errbf

    print("KERNEL_OK")
</pallas_src>

<mosaic_0001>
module attributes {stable_mosaic.version = 11 : i64} {
  func.func @_fused_mlp_kernel(%arg0: i32, %arg1: memref<8x32xf32, #tpu.memory_space<vmem>>, %arg2: memref<4x128x128xf32, #tpu.memory_space<vmem>>, %arg3: memref<4x1x128xf32, #tpu.memory_space<vmem>>, %arg4: memref<8x16xf32, #tpu.memory_space<vmem>>, %arg5: memref<8x128xf32, #tpu.memory_space<vmem>>) attributes {dimension_semantics = [#tpu.dimension_semantics<parallel>], iteration_bounds = array<i64: 1>, scalar_prefetch = 0 : i64, scratch_operands = 1 : i64, tpu.core_type = #tpu.core_type<tc>, window_params = [{transform_indices = @transform_0, window_bounds = array<i64: 8, 32>}, {pipeline_mode = #tpu.pipeline_mode<synchronous>, transform_indices = @transform_1, window_bounds = array<i64: 4, 128, 128>}, {pipeline_mode = #tpu.pipeline_mode<synchronous>, transform_indices = @transform_2, window_bounds = array<i64: 4, 1, 128>}, {transform_indices = @transform_3, window_bounds = array<i64: 8, 16>}]} {
    %cst = arith.constant 0.000000e+00 : f32
    %0 = vector.broadcast %cst : f32 to vector<8x128xf32>
    %c0 = arith.constant 0 : index
    %c0_0 = arith.constant 0 : index
    %1 = vector.load %arg5[%c0, %c0_0] : memref<8x128xf32, #tpu.memory_space<vmem>>, vector<8x128xf32>
    tpu.vector_store %arg5[%c0, %c0_0], %0 {strides = array<i32>} : memref<8x128xf32, #tpu.memory_space<vmem>>, vector<8x128xf32>,
    %c0_1 = arith.constant 0 : index
    %c0_2 = arith.constant 0 : index
    %2 = vector.load %arg1[%c0_1, %c0_2] : memref<8x32xf32, #tpu.memory_space<vmem>>, vector<8x32xf32>
    %c0_3 = arith.constant 0 : index
    %c0_4 = arith.constant 0 : index
    %3 = vector.load %arg5[%c0_3, %c0_4] : memref<8x128xf32, #tpu.memory_space<vmem>>, vector<8x32xf32>
    tpu.vector_store %arg5[%c0_3, %c0_4], %2 {strides = array<i32>} : memref<8x128xf32, #tpu.memory_space<vmem>>, vector<8x32xf32>,
    %c0_5 = arith.constant 0 : index
    %c0_6 = arith.constant 0 : index
    %4 = vector.load %arg5[%c0_5, %c0_6] : memref<8x128xf32, #tpu.memory_space<vmem>>, vector<8x128xf32>
    %c0_7 = arith.constant 0 : index
    %c0_8 = arith.constant 0 : index
    %c0_9 = arith.constant 0 : index
    %5 = vector.load %arg2[%c0_7, %c0_8, %c0_9] : memref<4x128x128xf32, #tpu.memory_space<vmem>>, vector<1x128x128xf32>
    %6 = vector.shape_cast %5 : vector<1x128x128xf32> to vector<128x128xf32>
    %c0_10 = arith.constant 0 : index
    %c0_11 = arith.constant 0 : index
    %c0_12 = arith.constant 0 : index
    %7 = vector.load %arg3[%c0_10, %c0_11, %c0_12] : memref<4x1x128xf32, #tpu.memory_space<vmem>>, vector<1x1x128xf32>
    %8 = vector.shape_cast %7 : vector<1x1x128xf32> to vector<1x128xf32>
    %cst_13 = arith.constant dense<0.000000e+00> : vector<8x128xf32>
    %9 = tpu.matmul %4, %6, %cst_13 {dimension_numbers = #tpu.dot_dimension_numbers<[1], [0], [0], [1], [0, 0, 1, 1], [], []>, precision = #tpu.contract_precision<fp32>} : vector<8x128xf32>, vector<128x128xf32>, vector<8x128xf32> -> vector<8x128xf32>
    %10 = vector.broadcast %8 : vector<1x128xf32> to vector<8x128xf32>
    %11 = arith.addf %9, %10 : vector<8x128xf32>
    %12 = arith.mulf %11, %11 : vector<8x128xf32>
    %cst_14 = arith.constant 0.0356774069 : f32
    %13 = vector.broadcast %cst_14 : f32 to vector<8x128xf32>
    %14 = arith.mulf %13, %12 : vector<8x128xf32>
    %cst_15 = arith.constant 0.797884583 : f32
    %15 = vector.broadcast %cst_15 : f32 to vector<8x128xf32>
    %16 = arith.addf %15, %14 : vector<8x128xf32>
    %17 = arith.mulf %11, %16 : vector<8x128xf32>
    %cst_16 = arith.constant 5.000000e-01 : f32
    %18 = vector.broadcast %cst_16 : f32 to vector<8x128xf32>
    %19 = arith.mulf %18, %11 : vector<8x128xf32>
    %20 = math.tanh %17 : vector<8x128xf32>
    %cst_17 = arith.constant 1.000000e+00 : f32
    %21 = vector.broadcast %cst_17 : f32 to vector<8x128xf32>
    %22 = arith.addf %21, %20 : vector<8x128xf32>
    %23 = arith.mulf %19, %22 : vector<8x128xf32>
    %24 = arith.addf %4, %23 : vector<8x128xf32>
    %c1 = arith.constant 1 : index
    %c0_18 = arith.constant 0 : index
    %c0_19 = arith.constant 0 : index
    %25 = vector.load %arg2[%c1, %c0_18, %c0_19] : memref<4x128x128xf32, #tpu.memory_space<vmem>>, vector<1x128x128xf32>
    %26 = vector.shape_cast %25 : vector<1x128x128xf32> to vector<128x128xf32>
    %c1_20 = arith.constant 1 : index
    %c0_21 = arith.constant 0 : index
    %c0_22 = arith.constant 0 : index
    %27 = vector.load %arg3[%c1_20, %c0_21, %c0_22] : memref<4x1x128xf32, #tpu.memory_space<vmem>>, vector<1x1x128xf32>
    %28 = vector.shape_cast %27 : vector<1x1x128xf32> to vector<1x128xf32>
    %cst_23 = arith.constant dense<0.000000e+00> : vector<8x128xf32>
    %29 = tpu.matmul %24, %26, %cst_23 {dimension_numbers = #tpu.dot_dimension_numbers<[1], [0], [0], [1], [0, 0, 1, 1], [], []>, precision = #tpu.contract_precision<fp32>} : vector<8x128xf32>, vector<128x128xf32>, vector<8x128xf32> -> vector<8x128xf32>
    %30 = vector.broadcast %28 : vector<1x128xf32> to vector<8x128xf32>
    %31 = arith.addf %29, %30 : vector<8x128xf32>
    %32 = arith.mulf %31, %31 : vector<8x128xf32>
    %cst_24 = arith.constant 0.0356774069 : f32
    %33 = vector.broadcast %cst_24 : f32 to vector<8x128xf32>
    %34 = arith.mulf %33, %32 : vector<8x128xf32>
    %cst_25 = arith.constant 0.797884583 : f32
    %35 = vector.broadcast %cst_25 : f32 to vector<8x128xf32>
    %36 = arith.addf %35, %34 : vector<8x128xf32>
    %37 = arith.mulf %31, %36 : vector<8x128xf32>
    %cst_26 = arith.constant 5.000000e-01 : f32
    %38 = vector.broadcast %cst_26 : f32 to vector<8x128xf32>
    %39 = arith.mulf %38, %31 : vector<8x128xf32>
    %40 = math.tanh %37 : vector<8x128xf32>
    %cst_27 = arith.constant 1.000000e+00 : f32
    %41 = vector.broadcast %cst_27 : f32 to vector<8x128xf32>
    %42 = arith.addf %41, %40 : vector<8x128xf32>
    %43 = arith.mulf %39, %42 : vector<8x128xf32>
    %44 = arith.addf %24, %43 : vector<8x128xf32>
    %c2 = arith.constant 2 : index
    %c0_28 = arith.constant 0 : index
    %c0_29 = arith.constant 0 : index
    %45 = vector.load %arg2[%c2, %c0_28, %c0_29] : memref<4x128x128xf32, #tpu.memory_space<vmem>>, vector<1x128x128xf32>
    %46 = vector.shape_cast %45 : vector<1x128x128xf32> to vector<128x128xf32>
    %c2_30 = arith.constant 2 : index
    %c0_31 = arith.constant 0 : index
    %c0_32 = arith.constant 0 : index
    %47 = vector.load %arg3[%c2_30, %c0_31, %c0_32] : memref<4x1x128xf32, #tpu.memory_space<vmem>>, vector<1x1x128xf32>
    %48 = vector.shape_cast %47 : vector<1x1x128xf32> to vector<1x128xf32>
    %cst_33 = arith.constant dense<0.000000e+00> : vector<8x128xf32>
    %49 = tpu.matmul %44, %46, %cst_33 {dimension_numbers = #tpu.dot_dimension_numbers<[1], [0], [0], [1], [0, 0, 1, 1], [], []>, precision = #tpu.contract_precision<fp32>} : vector<8x128xf32>, vector<128x128xf32>, vector<8x128xf32> -> vector<8x128xf32>
    %50 = vector.broadcast %48 : vector<1x128xf32> to vector<8x128xf32>
    %51 = arith.addf %49, %50 : vector<8x128xf32>
    %52 = arith.mulf %51, %51 : vector<8x128xf32>
    %cst_34 = arith.constant 0.0356774069 : f32
    %53 = vector.broadcast %cst_34 : f32 to vector<8x128xf32>
    %54 = arith.mulf %53, %52 : vector<8x128xf32>
    %cst_35 = arith.constant 0.797884583 : f32
    %55 = vector.broadcast %cst_35 : f32 to vector<8x128xf32>
    %56 = arith.addf %55, %54 : vector<8x128xf32>
    %57 = arith.mulf %51, %56 : vector<8x128xf32>
    %cst_36 = arith.constant 5.000000e-01 : f32
    %58 = vector.broadcast %cst_36 : f32 to vector<8x128xf32>
    %59 = arith.mulf %58, %51 : vector<8x128xf32>
    %60 = math.tanh %57 : vector<8x128xf32>
    %cst_37 = arith.constant 1.000000e+00 : f32
    %61 = vector.broadcast %cst_37 : f32 to vector<8x128xf32>
    %62 = arith.addf %61, %60 : vector<8x128xf32>
    %63 = arith.mulf %59, %62 : vector<8x128xf32>
    %64 = arith.addf %44, %63 : vector<8x128xf32>
    %c3 = arith.constant 3 : index
    %c0_38 = arith.constant 0 : index
    %c0_39 = arith.constant 0 : index
    %65 = vector.load %arg2[%c3, %c0_38, %c0_39] : memref<4x128x128xf32, #tpu.memory_space<vmem>>, vector<1x128x128xf32>
    %66 = vector.shape_cast %65 : vector<1x128x128xf32> to vector<128x128xf32>
    %c3_40 = arith.constant 3 : index
    %c0_41 = arith.constant 0 : index
    %c0_42 = arith.constant 0 : index
    %67 = vector.load %arg3[%c3_40, %c0_41, %c0_42] : memref<4x1x128xf32, #tpu.memory_space<vmem>>, vector<1x1x128xf32>
    %68 = vector.shape_cast %67 : vector<1x1x128xf32> to vector<1x128xf32>
    %cst_43 = arith.constant dense<0.000000e+00> : vector<8x128xf32>
    %69 = tpu.matmul %64, %66, %cst_43 {dimension_numbers = #tpu.dot_dimension_numbers<[1], [0], [0], [1], [0, 0, 1, 1], [], []>, precision = #tpu.contract_precision<fp32>} : vector<8x128xf32>, vector<128x128xf32>, vector<8x128xf32> -> vector<8x128xf32>
    %70 = vector.broadcast %68 : vector<1x128xf32> to vector<8x128xf32>
    %71 = arith.addf %69, %70 : vector<8x128xf32>
    %72 = arith.mulf %71, %71 : vector<8x128xf32>
    %cst_44 = arith.constant 0.0356774069 : f32
    %73 = vector.broadcast %cst_44 : f32 to vector<8x128xf32>
    %74 = arith.mulf %73, %72 : vector<8x128xf32>
    %cst_45 = arith.constant 0.797884583 : f32
    %75 = vector.broadcast %cst_45 : f32 to vector<8x128xf32>
    %76 = arith.addf %75, %74 : vector<8x128xf32>
    %77 = arith.mulf %71, %76 : vector<8x128xf32>
    %cst_46 = arith.constant 5.000000e-01 : f32
    %78 = vector.broadcast %cst_46 : f32 to vector<8x128xf32>
    %79 = arith.mulf %78, %71 : vector<8x128xf32>
    %80 = math.tanh %77 : vector<8x128xf32>
    %cst_47 = arith.constant 1.000000e+00 : f32
    %81 = vector.broadcast %cst_47 : f32 to vector<8x128xf32>
    %82 = arith.addf %81, %80 : vector<8x128xf32>
    %83 = arith.mulf %79, %82 : vector<8x128xf32>
    %84 = vector.extract_strided_slice %83 {offsets = [0, 0], sizes = [8, 16], strides = [1, 1]} : vector<8x128xf32> to vector<8x16xf32>
    %c0_48 = arith.constant 0 : index
    %c0_49 = arith.constant 0 : index
    %85 = vector.load %arg4[%c0_48, %c0_49] : memref<8x16xf32, #tpu.memory_space<vmem>>, vector<8x16xf32>
    tpu.vector_store %arg4[%c0_48, %c0_49], %84 {strides = array<i32>} : memref<8x16xf32, #tpu.memory_space<vmem>>, vector<8x16xf32>,
    return
  }
  func.func @transform_0(%arg0: i32) -> (i32, i32) {
    %c0_i32 = arith.constant 0 : i32
    %c0_i32_0 = arith.constant 0 : i32
    return %arg0, %c0_i32 : i32, i32
  }
  func.func @transform_1(%arg0: i32) -> (i32, i32, i32) {
    %c0_i32 = arith.constant 0 : i32
    %c0_i32_0 = arith.constant 0 : i32
    %c0_i32_1 = arith.constant 0 : i32
    %c0_i32_2 = arith.constant 0 : i32
    return %c0_i32, %c0_i32_0, %c0_i32_1 : i32, i32, i32
  }
  func.func @transform_2(%arg0: i32) -> (i32, i32, i32) {
    %c0_i32 = arith.constant 0 : i32
    %c0_i32_0 = arith.constant 0 : i32
    %c0_i32_1 = arith.constant 0 : i32
    %c0_i32_2 = arith.constant 0 : i32
    return %c0_i32, %c0_i32_0, %c0_i32_1 : i32, i32, i32
  }
  func.func @transform_3(%arg0: i32) -> (i32, i32) {
    %c0_i32 = arith.constant 0 : i32
    %c0_i32_0 = arith.constant 0 : i32
    return %arg0, %c0_i32 : i32, i32
  }
}

</mosaic_0001>

<llo_original>
// kernel: ex_residual_connections.1
$region0: #{ex_residual_connections.1}
  #allocation0 [shape = 'u32[]', space=smem, size = 0x4, offset = 0x4, fixed_abs, tag = 'smem constant byte address 0x4 - core index']
  #allocation1 [shape = 'u32[72,128]{1,0:T(1,128)}', space=vmem, size = 0x9000, scoped, tag = 'internal scratch']
  #allocation2 [shape = 'f32[8,128]{1,0:T(8,128)}', space=vmem, size = 0x1000, scoped, tag = 'scratch operand']
  %s0 = inlined_call_operand.hbm [shape: f32[8,32], index: 0, kind: input, shape index: {}]
  %s1 = inlined_call_operand.hbm [shape: f32[4,128,128], index: 1, kind: input, shape index: {}]
  %s2 = inlined_call_operand.hbm [shape: f32[4,1,128], index: 2, kind: input, shape index: {}]
  %s3 = inlined_call_operand.hbm [shape: f32[8,16], index: 3, kind: output, shape index: {}]
  %s4 = sld [smem:[#allocation0]]
  $region34: #{ex_residual_connections.1} parent=0
    _
  %s6 = ssub.s32 1, %s4
  %s7 = scalar_select 0, %s6, %s4
  $region1: #{ex_residual_connections.1} parent=0
    #allocation3 [shape = 'u8[4096]{0}', space=vmem, size = 0x1000, scoped, tag = 'input window, operand 0, single buffered']
    #allocation4 [shape = 's32[1]{0}', space=sflag, size = 0x4, scoped, tag = 'scoped memory for ex_residual_connections.1']
    #allocation5 [shape = 's32[1]{0}', space=sflag, size = 0x4, scoped, tag = 'scoped memory for ex_residual_connections.1']
    #allocation6 [shape = 'u8[262144]{0}', space=vmem, size = 0x40000, scoped, tag = 'input window, operand 1, single buffered']
    #allocation7 [shape = 's32[1]{0}', space=sflag, size = 0x4, scoped, tag = 'scoped memory for ex_residual_connections.1']
    #allocation8 [shape = 'u8[2048]{0}', space=vmem, size = 0x800, scoped, tag = 'input window, operand 2, single buffered']
    #allocation9 [shape = 'u8[4096]{0}', space=vmem, size = 0x1000, scoped, tag = 'output window, operand 0, single buffered']
    %8 = vsyncpa [#allocation4], 0
    %9 = vsyncpa [#allocation7], 0
    %10 = vsyncpa [#allocation5], 0
    // Predicated region
    $region2: #{ex_residual_connections.1} parent=1 // pred_check
      _
    $region3: #{ex_residual_connections.1} parent=1 // pred_check_branch
      %12 = sbr.rel (0) target = $region5
    $region4: #{ex_residual_connections.1} parent=1 // pred_region
      %14 = vsyncadd [#allocation4], 0
      %s16 = sshll.u32 %s0, 4
      %s17 = int_to_ptr.hbm [resolvable:$true] %s16
      %s18 = sshll.u32 [#allocation3], 4
      %s19 = int_to_ptr.vmem [resolvable:$true] %s18
      %21 = dma.hbm_to_vmem [thread:$0]  %s17, 128, %s19, [#allocation4]
    $region5: #{ex_residual_connections.1} parent=1 // pred_fallthru
      _
    // Predicated region
    $region6: #{ex_residual_connections.1} parent=1 // pred_check
      _
    $region7: #{ex_residual_connections.1} parent=1 // pred_check_branch
      %23 = sbr.rel (0) target = $region9
    $region8: #{ex_residual_connections.1} parent=1 // pred_region
      %25 = vsyncadd [#allocation7], 0
      %s26 = sshll.u32 %s1, 4
      %s27 = int_to_ptr.hbm [resolvable:$true] %s26
      %s28 = sshll.u32 [#allocation6], 4
      %s29 = int_to_ptr.vmem [resolvable:$true] %s28
      %34 = dma.hbm_to_vmem [thread:$0]  %s27, 8192, %s29, [#allocation7], 128, 128, 8
    $region9: #{ex_residual_connections.1} parent=1 // pred_fallthru
      _
    // Predicated region
    $region10: #{ex_residual_connections.1} parent=1 // pred_check
      _
    $region11: #{ex_residual_connections.1} parent=1 // pred_check_branch
      %36 = sbr.rel (0) target = $region13
    $region12: #{ex_residual_connections.1} parent=1 // pred_region
      %38 = vsyncadd [#allocation7], 0
      %s39 = sshll.u32 %s2, 4
      %s40 = int_to_ptr.hbm [resolvable:$true] %s39
      %s41 = sshll.u32 [#allocation8], 4
      %s42 = int_to_ptr.vmem [resolvable:$true] %s41
      %47 = dma.hbm_to_vmem [thread:$0]  %s40, 64, %s42, [#allocation7], 16, 16, 1
    $region13: #{ex_residual_connections.1} parent=1 // pred_fallthru
      _
    // Predicated region
    $region14: #{ex_residual_connections.1} parent=1 // pred_check
      _
    $region15: #{ex_residual_connections.1} parent=1 // pred_check_branch
      %49 = sbr.rel (0) target = $region17
    $region16: #{ex_residual_connections.1} parent=1 // pred_region
      %51 = dma.done [#allocation4], 128
    $region17: #{ex_residual_connections.1} parent=1 // pred_fallthru
      _
    // Predicated region
    $region18: #{ex_residual_connections.1} parent=1 // pred_check
      _
    $region19: #{ex_residual_connections.1} parent=1 // pred_check_branch
      %53 = sbr.rel (0) target = $region21
    $region20: #{ex_residual_connections.1} parent=1 // pred_region
      %55 = dma.done [#allocation7], 8192
    $region21: #{ex_residual_connections.1} parent=1 // pred_fallthru
      _
    // Predicated region
    $region22: #{ex_residual_connections.1} parent=1 // pred_check
      _
    $region23: #{ex_residual_connections.1} parent=1 // pred_check_branch
      %57 = sbr.rel (0) target = $region25
    $region24: #{ex_residual_connections.1} parent=1 // pred_region
      %59 = dma.done [#allocation7], 64
    $region25: #{ex_residual_connections.1} parent=1 // pred_fallthru
      _
    %60 = vst [vmem:[#allocation2] sm:$0xff] 0.0
    %v61 = vld [vmem:[#allocation3] sm:$0xff]
    %vm62 = vcmask 261120
    %63 = vst.msk [vmem:[#allocation2] sm:$0xff] %vm62, %v61
    %v64 = vld [vmem:[#allocation2] sm:$0xff]
    %v65 = vld [vmem:[#allocation6] sm:$0xff]
    %v66 = vld [vmem:[#allocation6 + $0x8] sm:$0xff]
    %v67 = vld [vmem:[#allocation6 + $0x10] sm:$0xff]
    %v68 = vld [vmem:[#allocation6 + $0x18] sm:$0xff]
    %v69 = vld [vmem:[#allocation6 + $0x20] sm:$0xff]
    %v70 = vld [vmem:[#allocation6 + $0x28] sm:$0xff]
    %v71 = vld [vmem:[#allocation6 + $0x30] sm:$0xff]
    %v72 = vld [vmem:[#allocation6 + $0x38] sm:$0xff]
    %v73 = vld [vmem:[#allocation6 + $0x40] sm:$0xff]
    %v74 = vld [vmem:[#allocation6 + $0x48] sm:$0xff]
    %v75 = vld [vmem:[#allocation6 + $0x50] sm:$0xff]
    %v76 = vld [vmem:[#allocation6 + $0x58] sm:$0xff]
    %v77 = vld [vmem:[#allocation6 + $0x60] sm:$0xff]
    %v78 = vld [vmem:[#allocation6 + $0x68] sm:$0xff]
    %v79 = vld [vmem:[#allocation6 + $0x70] sm:$0xff]
    %v80 = vld [vmem:[#allocation6 + $0x78] sm:$0xff]
    %v81 = vld [vmem:[#allocation8] sm:$0x1]
    %v83 = vperm.slane %v81, 0
    %v85 = vand.u32 %v80, 4294901760
    %86 = vmatpush.msra.mxu0 %v85
    %v87 = vand.u32 %v79, 4294901760
    %88 = vmatpush.msra.mxu0 %v87
    %v89 = vand.u32 %v78, 4294901760
    %90 = vmatpush.msra.mxu0 %v89
    %v91 = vand.u32 %v77, 4294901760
    %92 = vmatpush.msra.mxu0 %v91
    %v93 = vand.u32 %v76, 4294901760
    %94 = vmatpush.msra.mxu0 %v93
    %v95 = vand.u32 %v75, 4294901760
    %96 = vmatpush.msra.mxu0 %v95
    %v97 = vand.u32 %v74, 4294901760
    %98 = vmatpush.msra.mxu0 %v97
    %v99 = vand.u32 %v73, 4294901760
    %100 = vmatpush.msra.mxu0 %v99
    %v101 = vand.u32 %v72, 4294901760
    %102 = vmatpush.msra.mxu0 %v101
    %v103 = vand.u32 %v71, 4294901760
    %104 = vmatpush.msra.mxu0 %v103
    %v105 = vand.u32 %v70, 4294901760
    %106 = vmatpush.msra.mxu0 %v105
    %v107 = vand.u32 %v69, 4294901760
    %108 = vmatpush.msra.mxu0 %v107
    %v109 = vand.u32 %v68, 4294901760
    %110 = vmatpush.msra.mxu0 %v109
    %v111 = vand.u32 %v67, 4294901760
    %112 = vmatpush.msra.mxu0 %v111
    %v113 = vand.u32 %v66, 4294901760
    %114 = vmatpush.msra.mxu0 %v113
    %v115 = vand.u32 %v65, 4294901760
    %116 = vmatpush.msra.mxu0 %v115
    %v117 = vand.u32 %v64, 4294901760
    %v118 = vsub.f32 %v64, %v117
    %v119 = vand.u32 %v118, 4294901760
    %v120 = vsub.f32 %v118, %v119
    %v121 = vand.u32 %v120, 4294901760
    %122 = vmatmul.f32.gmra.mxu0 %v121
    %v123 = vpop.f32.mrf.mxu0
    %v124 = vadd.f32 %v83, %v123
    %125 = vdwg.mxu0
    %v126 = vand.u32 %v80, 4294901760
    %v127 = vsub.f32 %v80, %v126
    %v128 = vand.u32 %v127, 4294901760
    %v129 = vsub.f32 %v127, %v128
    %v130 = vand.u32 %v129, 4294901760
    %131 = vmatpush.msra.mxu0 %v130
    %v132 = vand.u32 %v79, 4294901760
    %v133 = vsub.f32 %v79, %v132
    %v134 = vand.u32 %v133, 4294901760
    %v135 = vsub.f32 %v133, %v134
    %v136 = vand.u32 %v135, 4294901760
    %137 = vmatpush.msra.mxu0 %v136
    %v138 = vand.u32 %v78, 4294901760
    %v139 = vsub.f32 %v78, %v138
    %v140 = vand.u32 %v139, 4294901760
    %v141 = vsub.f32 %v139, %v140
    %v142 = vand.u32 %v141, 4294901760
    %143 = vmatpush.msra.mxu0 %v142
    %v144 = vand.u32 %v77, 4294901760
    %v145 = vsub.f32 %v77, %v144
    %v146 = vand.u32 %v145, 4294901760
    %v147 = vsub.f32 %v145, %v146
    %v148 = vand.u32 %v147, 4294901760
    %149 = vmatpush.msra.mxu0 %v148
    %v150 = vand.u32 %v76, 4294901760
    %v151 = vsub.f32 %v76, %v150
    %v152 = vand.u32 %v151, 4294901760
    %v153 = vsub.f32 %v151, %v152
    %v154 = vand.u32 %v153, 4294901760
    %155 = vmatpush.msra.mxu0 %v154
    %v156 = vand.u32 %v75, 4294901760
    %v157 = vsub.f32 %v75, %v156
    %v158 = vand.u32 %v157, 4294901760
    %v159 = vsub.f32 %v157, %v158
    %v160 = vand.u32 %v159, 4294901760
    %161 = vmatpush.msra.mxu0 %v160
    %v162 = vand.u32 %v74, 4294901760
    %v163 = vsub.f32 %v74, %v162
    %v164 = vand.u32 %v163, 4294901760
    %v165 = vsub.f32 %v163, %v164
    %v166 = vand.u32 %v165, 4294901760
    %167 = vmatpush.msra.mxu0 %v166
    %v168 = vand.u32 %v73, 4294901760
    %v169 = vsub.f32 %v73, %v168
    %v170 = vand.u32 %v169, 4294901760
    %v171 = vsub.f32 %v169, %v170
    %v172 = vand.u32 %v171, 4294901760
    %173 = vmatpush.msra.mxu0 %v172
    %v174 = vand.u32 %v72, 4294901760
    %v175 = vsub.f32 %v72, %v174
    %v176 = vand.u32 %v175, 4294901760
    %v177 = vsub.f32 %v175, %v176
    %v178 = vand.u32 %v177, 4294901760
    %179 = vmatpush.msra.mxu0 %v178
    %v180 = vand.u32 %v71, 4294901760
    %v181 = vsub.f32 %v71, %v180
    %v182 = vand.u32 %v181, 4294901760
    %v183 = vsub.f32 %v181, %v182
    %v184 = vand.u32 %v183, 4294901760
    %185 = vmatpush.msra.mxu0 %v184
    %v186 = vand.u32 %v70, 4294901760
    %v187 = vsub.f32 %v70, %v186
    %v188 = vand.u32 %v187, 4294901760
    %v189 = vsub.f32 %v187, %v188
    %v190 = vand.u32 %v189, 4294901760
    %191 = vmatpush.msra.mxu0 %v190
    %v192 = vand.u32 %v69, 4294901760
    %v193 = vsub.f32 %v69, %v192
    %v194 = vand.u32 %v193, 4294901760
    %v195 = vsub.f32 %v193, %v194
    %v196 = vand.u32 %v195, 4294901760
    %197 = vmatpush.msra.mxu0 %v196
    %v198 = vand.u32 %v68, 4294901760
    %v199 = vsub.f32 %v68, %v198
    %v200 = vand.u32 %v199, 4294901760
    %v201 = vsub.f32 %v199, %v200
    %v202 = vand.u32 %v201, 4294901760
    %203 = vmatpush.msra.mxu0 %v202
    %v204 = vand.u32 %v67, 4294901760
    %v205 = vsub.f32 %v67, %v204
    %v206 = vand.u32 %v205, 4294901760
    %v207 = vsub.f32 %v205, %v206
    %v208 = vand.u32 %v207, 4294901760
    %209 = vmatpush.msra.mxu0 %v208
    %v210 = vand.u32 %v66, 4294901760
    %v211 = vsub.f32 %v66, %v210
    %v212 = vand.u32 %v211, 4294901760
    %v213 = vsub.f32 %v211, %v212
    %v214 = vand.u32 %v213, 4294901760
    %215 = vmatpush.msra.mxu0 %v214
    %v216 = vand.u32 %v65, 4294901760
    %v217 = vsub.f32 %v65, %v216
    %v218 = vand.u32 %v217, 4294901760
    %v219 = vsub.f32 %v217, %v218
    %v220 = vand.u32 %v219, 4294901760
    %221 = vmatpush.msra.mxu0 %v220
    %v222 = vand.u32 %v64, 4294901760
    %223 = vmatmul.f32.gmra.mxu0 %v222
    %v224 = vpop.f32.mrf.mxu0
    %v225 = vadd.f32 %v124, %v224
    %226 = vdwg.mxu0
    %v227 = vand.u32 %v80, 4294901760
    %v228 = vsub.f32 %v80, %v227
    %229 = vmatpush.msra.mxu0 %v228
    %v230 = vand.u32 %v79, 4294901760
    %v231 = vsub.f32 %v79, %v230
    %232 = vmatpush.msra.mxu0 %v231
    %v233 = vand.u32 %v78, 4294901760
    %v234 = vsub.f32 %v78, %v233
    %235 = vmatpush.msra.mxu0 %v234
    %v236 = vand.u32 %v77, 4294901760
    %v237 = vsub.f32 %v77, %v236
    %238 = vmatpush.msra.mxu0 %v237
    %v239 = vand.u32 %v76, 4294901760
    %v240 = vsub.f32 %v76, %v239
    %241 = vmatpush.msra.mxu0 %v240
    %v242 = vand.u32 %v75, 4294901760
    %v243 = vsub.f32 %v75, %v242
    %244 = vmatpush.msra.mxu0 %v243
    %v245 = vand.u32 %v74, 4294901760
    %v246 = vsub.f32 %v74, %v245
    %247 = vmatpush.msra.mxu0 %v246
    %v248 = vand.u32 %v73, 4294901760
    %v249 = vsub.f32 %v73, %v248
    %250 = vmatpush.msra.mxu0 %v249
    %v251 = vand.u32 %v72, 4294901760
    %v252 = vsub.f32 %v72, %v251
    %253 = vmatpush.msra.mxu0 %v252
    %v254 = vand.u32 %v71, 4294901760
    %v255 = vsub.f32 %v71, %v254
    %256 = vmatpush.msra.mxu0 %v255
    %v257 = vand.u32 %v70, 4294901760
    %v258 = vsub.f32 %v70, %v257
    %259 = vmatpush.msra.mxu0 %v258
    %v260 = vand.u32 %v69, 4294901760
    %v261 = vsub.f32 %v69, %v260
    %262 = vmatpush.msra.mxu0 %v261
    %v263 = vand.u32 %v68, 4294901760
    %v264 = vsub.f32 %v68, %v263
    %265 = vmatpush.msra.mxu0 %v264
    %v266 = vand.u32 %v67, 4294901760
    %v267 = vsub.f32 %v67, %v266
    %268 = vmatpush.msra.mxu0 %v267
    %v269 = vand.u32 %v66, 4294901760
    %v270 = vsub.f32 %v66, %v269
    %271 = vmatpush.msra.mxu0 %v270
    %v272 = vand.u32 %v65, 4294901760
    %v273 = vsub.f32 %v65, %v272
    %274 = vmatpush.msra.mxu0 %v273
    %v275 = vand.u32 %v64, 4294901760
    %v276 = vsub.f32 %v64, %v275
    %277 = vmatmul.f32.gmra.mxu0 %v276
    %v278 = vpop.f32.mrf.mxu0
    %v279 = vadd.f32 %v225, %v278
    %280 = vdwg.mxu0
    %v281 = vand.u32 %v80, 4294901760
    %282 = vmatpush.msra.mxu0 %v281
    %v283 = vand.u32 %v79, 4294901760
    %284 = vmatpush.msra.mxu0 %v283
    %v285 = vand.u32 %v78, 4294901760
    %286 = vmatpush.msra.mxu0 %v285
    %v287 = vand.u32 %v77, 4294901760
    %288 = vmatpush.msra.mxu0 %v287
    %v289 = vand.u32 %v76, 4294901760
    %290 = vmatpush.msra.mxu0 %v289
    %v291 = vand.u32 %v75, 4294901760
    %292 = vmatpush.msra.mxu0 %v291
    %v293 = vand.u32 %v74, 4294901760
    %294 = vmatpush.msra.mxu0 %v293
    %v295 = vand.u32 %v73, 4294901760
    %296 = vmatpush.msra.mxu0 %v295
    %v297 = vand.u32 %v72, 4294901760
    %298 = vmatpush.msra.mxu0 %v297
    %v299 = vand.u32 %v71, 4294901760
    %300 = vmatpush.msra.mxu0 %v299
    %v301 = vand.u32 %v70, 4294901760
    %302 = vmatpush.msra.mxu0 %v301
    %v303 = vand.u32 %v69, 4294901760
    %304 = vmatpush.msra.mxu0 %v303
    %v305 = vand.u32 %v68, 4294901760
    %306 = vmatpush.msra.mxu0 %v305
    %v307 = vand.u32 %v67, 4294901760
    %308 = vmatpush.msra.mxu0 %v307
    %v309 = vand.u32 %v66, 4294901760
    %310 = vmatpush.msra.mxu0 %v309
    %v311 = vand.u32 %v65, 4294901760
    %312 = vmatpush.msra.mxu0 %v311
    %v313 = vand.u32 %v64, 4294901760
    %v314 = vsub.f32 %v64, %v313
    %v315 = vand.u32 %v314, 4294901760
    %316 = vmatmul.f32.gmra.mxu0 %v315
    %v317 = vpop.f32.mrf.mxu0
    %v318 = vadd.f32 %v279, %v317
    %319 = vdwg.mxu0
    %v320 = vand.u32 %v80, 4294901760
    %v321 = vsub.f32 %v80, %v320
    %v322 = vand.u32 %v321, 4294901760
    %323 = vmatpush.msra.mxu0 %v322
    %v324 = vand.u32 %v79, 4294901760
    %v325 = vsub.f32 %v79, %v324
    %v326 = vand.u32 %v325, 4294901760
    %327 = vmatpush.msra.mxu0 %v326
    %v328 = vand.u32 %v78, 4294901760
    %v329 = vsub.f32 %v78, %v328
    %v330 = vand.u32 %v329, 4294901760
    %331 = vmatpush.msra.mxu0 %v330
    %v332 = vand.u32 %v77, 4294901760
    %v333 = vsub.f32 %v77, %v332
    %v334 = vand.u32 %v333, 4294901760
    %335 = vmatpush.msra.mxu0 %v334
    %v336 = vand.u32 %v76, 4294901760
    %v337 = vsub.f32 %v76, %v336
    %v338 = vand.u32 %v337, 4294901760
    %339 = vmatpush.msra.mxu0 %v338
    %v340 = vand.u32 %v75, 4294901760
    %v341 = vsub.f32 %v75, %v340
    %v342 = vand.u32 %v341, 4294901760
    %343 = vmatpush.msra.mxu0 %v342
    %v344 = vand.u32 %v74, 4294901760
    %v345 = vsub.f32 %v74, %v344
    %v346 = vand.u32 %v345, 4294901760
    %347 = vmatpush.msra.mxu0 %v346
    %v348 = vand.u32 %v73, 4294901760
    %v349 = vsub.f32 %v73, %v348
    %v350 = vand.u32 %v349, 4294901760
    %351 = vmatpush.msra.mxu0 %v350
    %v352 = vand.u32 %v72, 4294901760
    %v353 = vsub.f32 %v72, %v352
    %v354 = vand.u32 %v353, 4294901760
    %355 = vmatpush.msra.mxu0 %v354
    %v356 = vand.u32 %v71, 4294901760
    %v357 = vsub.f32 %v71, %v356
    %v358 = vand.u32 %v357, 4294901760
    %359 = vmatpush.msra.mxu0 %v358
    %v360 = vand.u32 %v70, 4294901760
    %v361 = vsub.f32 %v70, %v360
    %v362 = vand.u32 %v361, 4294901760
    %363 = vmatpush.msra.mxu0 %v362
    %v364 = vand.u32 %v69, 4294901760
    %v365 = vsub.f32 %v69, %v364
    %v366 = vand.u32 %v365, 4294901760
    %367 = vmatpush.msra.mxu0 %v366
    %v368 = vand.u32 %v68, 4294901760
    %v369 = vsub.f32 %v68, %v368
    %v370 = vand.u32 %v369, 4294901760
    %371 = vmatpush.msra.mxu0 %v370
    %v372 = vand.u32 %v67, 4294901760
    %v373 = vsub.f32 %v67, %v372
    %v374 = vand.u32 %v373, 4294901760
    %375 = vmatpush.msra.mxu0 %v374
    %v376 = vand.u32 %v66, 4294901760
    %v377 = vsub.f32 %v66, %v376
    %v378 = vand.u32 %v377, 4294901760
    %379 = vmatpush.msra.mxu0 %v378
    %v380 = vand.u32 %v65, 4294901760
    %v381 = vsub.f32 %v65, %v380
    %v382 = vand.u32 %v381, 4294901760
    %383 = vmatpush.msra.mxu0 %v382
    %v384 = vand.u32 %v64, 4294901760
    %385 = vmatmul.f32.gmra.mxu0 %v384
    %v386 = vpop.f32.mrf.mxu0
    %v387 = vadd.f32 %v318, %v386
    %388 = vdwg.mxu0
    %v389 = vand.u32 %v80, 4294901760
    %390 = vmatpush.msra.mxu0 %v389
    %v391 = vand.u32 %v79, 4294901760
    %392 = vmatpush.msra.mxu0 %v391
    %v393 = vand.u32 %v78, 4294901760
    %394 = vmatpush.msra.mxu0 %v393
    %v395 = vand.u32 %v77, 4294901760
    %396 = vmatpush.msra.mxu0 %v395
    %v397 = vand.u32 %v76, 4294901760
    %398 = vmatpush.msra.mxu0 %v397
    %v399 = vand.u32 %v75, 4294901760
    %400 = vmatpush.msra.mxu0 %v399
    %v401 = vand.u32 %v74, 4294901760
    %402 = vmatpush.msra.mxu0 %v401
    %v403 = vand.u32 %v73, 4294901760
    %404 = vmatpush.msra.mxu0 %v403
    %v405 = vand.u32 %v72, 4294901760
    %406 = vmatpush.msra.mxu0 %v405
    %v407 = vand.u32 %v71, 4294901760
    %408 = vmatpush.msra.mxu0 %v407
    %v409 = vand.u32 %v70, 4294901760
    %410 = vmatpush.msra.mxu0 %v409
    %v411 = vand.u32 %v69, 4294901760
    %412 = vmatpush.msra.mxu0 %v411
    %v413 = vand.u32 %v68, 4294901760
    %414 = vmatpush.msra.mxu0 %v413
    %v415 = vand.u32 %v67, 4294901760
    %416 = vmatpush.msra.mxu0 %v415
    %v417 = vand.u32 %v66, 4294901760
    %418 = vmatpush.msra.mxu0 %v417
    %v419 = vand.u32 %v65, 4294901760
    %420 = vmatpush.msra.mxu0 %v419
    %v421 = vand.u32 %v64, 4294901760
    %422 = vmatmul.f32.gmra.mxu0 %v421
    %v423 = vpop.f32.mrf.mxu0
    %v424 = vadd.f32 %v387, %v423
    %425 = vdwg.mxu0
    %v426 = vmul.f32 %v424, %v424
    %v427 = vmul.f32 %v426, 0.035677407
    %v428 = vadd.f32 %v427, 0.7978846
    %v429 = vmul.f32 %v424, %v428
    %v430 = vmul.f32 %v424, 0.5
    %v431 = vtanh.pop %v429
    %v432 = vadd.f32 %v431, 1.0
    %v433 = vmul.f32 %v430, %v432
    %v434 = vadd.f32 %v64, %v433
    %s435 = scalar_lea.vmem [#allocation6], 128
    %v436 = vld [vmem:[%s435] sm:$0xff]
    %v437 = vld [vmem:[%s435 + $0x8] sm:$0xff]
    %v438 = vld [vmem:[%s435 + $0x10] sm:$0xff]
    %v439 = vld [vmem:[%s435 + $0x18] sm:$0xff]
    %v440 = vld [vmem:[%s435 + $0x20] sm:$0xff]
    %v441 = vld [vmem:[%s435 + $0x28] sm:$0xff]
    %v442 = vld [vmem:[%s435 + $0x30] sm:$0xff]
    %v443 = vld [vmem:[%s435 + $0x38] sm:$0xff]
    %v444 = vld [vmem:[%s435 + $0x40] sm:$0xff]
    %v445 = vld [vmem:[%s435 + $0x48] sm:$0xff]
    %v446 = vld [vmem:[%s435 + $0x50] sm:$0xff]
    %v447 = vld [vmem:[%s435 + $0x58] sm:$0xff]
    %v448 = vld [vmem:[%s435 + $0x60] sm:$0xff]
    %v449 = vld [vmem:[%s435 + $0x68] sm:$0xff]
    %v450 = vld [vmem:[%s435 + $0x70] sm:$0xff]
    %v451 = vld [vmem:[%s435 + $0x78] sm:$0xff]
    %s452 = scalar_lea.vmem [#allocation8], 1
    %v453 = vld [vmem:[%s452] sm:$0x1]
    %v455 = vperm.slane %v453, 0
    %v457 = vand.u32 %v451, 4294901760
    %458 = vmatpush.msra.mxu0 %v457
    %v459 = vand.u32 %v450, 4294901760
    %460 = vmatpush.msra.mxu0 %v459
    %v461 = vand.u32 %v449, 4294901760
    %462 = vmatpush.msra.mxu0 %v461
    %v463 = vand.u32 %v448, 4294901760
    %464 = vmatpush.msra.mxu0 %v463
    %v465 = vand.u32 %v447, 4294901760
    %466 = vmatpush.msra.mxu0 %v465
    %v467 = vand.u32 %v446, 4294901760
    %468 = vmatpush.msra.mxu0 %v467
    %v469 = vand.u32 %v445, 4294901760
    %470 = vmatpush.msra.mxu0 %v469
    %v471 = vand.u32 %v444, 4294901760
    %472 = vmatpush.msra.mxu0 %v471
    %v473 = vand.u32 %v443, 4294901760
    %474 = vmatpush.msra.mxu0 %v473
    %v475 = vand.u32 %v442, 4294901760
    %476 = vmatpush.msra.mxu0 %v475
    %v477 = vand.u32 %v441, 4294901760
    %478 = vmatpush.msra.mxu0 %v477
    %v479 = vand.u32 %v440, 4294901760
    %480 = vmatpush.msra.mxu0 %v479
    %v481 = vand.u32 %v439, 4294901760
    %482 = vmatpush.msra.mxu0 %v481
    %v483 = vand.u32 %v438, 4294901760
    %484 = vmatpush.msra.mxu0 %v483
    %v485 = vand.u32 %v437, 4294901760
    %486 = vmatpush.msra.mxu0 %v485
    %v487 = vand.u32 %v436, 4294901760
    %488 = vmatpush.msra.mxu0 %v487
    %v489 = vand.u32 %v434, 4294901760
    %v490 = vsub.f32 %v434, %v489
    %v491 = vand.u32 %v490, 4294901760
    %v492 = vsub.f32 %v490, %v491
    %v493 = vand.u32 %v492, 4294901760
    %494 = vmatmul.f32.gmra.mxu0 %v493
    %v495 = vpop.f32.mrf.mxu0
    %v496 = vadd.f32 %v455, %v495
    %497 = vdwg.mxu0
    %v498 = vand.u32 %v451, 4294901760
    %v499 = vsub.f32 %v451, %v498
    %v500 = vand.u32 %v499, 4294901760
    %v501 = vsub.f32 %v499, %v500
    %v502 = vand.u32 %v501, 4294901760
    %503 = vmatpush.msra.mxu0 %v502
    %v504 = vand.u32 %v450, 4294901760
    %v505 = vsub.f32 %v450, %v504
    %v506 = vand.u32 %v505, 4294901760
    %v507 = vsub.f32 %v505, %v506
    %v508 = vand.u32 %v507, 4294901760
    %509 = vmatpush.msra.mxu0 %v508
    %v510 = vand.u32 %v449, 4294901760
    %v511 = vsub.f32 %v449, %v510
    %v512 = vand.u32 %v511, 4294901760
    %v513 = vsub.f32 %v511, %v512
    %v514 = vand.u32 %v513, 4294901760
    %515 = vmatpush.msra.mxu0 %v514
    %v516 = vand.u32 %v448, 4294901760
    %v517 = vsub.f32 %v448, %v516
    %v518 = vand.u32 %v517, 4294901760
    %v519 = vsub.f32 %v517, %v518
    %v520 = vand.u32 %v519, 4294901760
    %521 = vmatpush.msra.mxu0 %v520
    %v522 = vand.u32 %v447, 4294901760
    %v523 = vsub.f32 %v447, %v522
    %v524 = vand.u32 %v523, 4294901760
    %v525 = vsub.f32 %v523, %v524
    %v526 = vand.u32 %v525, 4294901760
    %527 = vmatpush.msra.mxu0 %v526
    %v528 = vand.u32 %v446, 4294901760
    %v529 = vsub.f32 %v446, %v528
    %v530 = vand.u32 %v529, 4294901760
    %v531 = vsub.f32 %v529, %v530
    %v532 = vand.u32 %v531, 4294901760
    %533 = vmatpush.msra.mxu0 %v532
    %v534 = vand.u32 %v445, 4294901760
    %v535 = vsub.f32 %v445, %v534
    %v536 = vand.u32 %v535, 4294901760
    %v537 = vsub.f32 %v535, %v536
    %v538 = vand.u32 %v537, 4294901760
    %539 = vmatpush.msra.mxu0 %v538
    %v540 = vand.u32 %v444, 4294901760
    %v541 = vsub.f32 %v444, %v540
    %v542 = vand.u32 %v541, 4294901760
    %v543 = vsub.f32 %v541, %v542
    %v544 = vand.u32 %v543, 4294901760
    %545 = vmatpush.msra.mxu0 %v544
    %v546 = vand.u32 %v443, 4294901760
    %v547 = vsub.f32 %v443, %v546
    %v548 = vand.u32 %v547, 4294901760
    %v549 = vsub.f32 %v547, %v548
    %v550 = vand.u32 %v549, 4294901760
    %551 = vmatpush.msra.mxu0 %v550
    %v552 = vand.u32 %v442, 4294901760
    %v553 = vsub.f32 %v442, %v552
    %v554 = vand.u32 %v553, 4294901760
    %v555 = vsub.f32 %v553, %v554
    %v556 = vand.u32 %v555, 4294901760
    %557 = vmatpush.msra.mxu0 %v556
    %v558 = vand.u32 %v441, 4294901760
    %v559 = vsub.f32 %v441, %v558
    %v560 = vand.u32 %v559, 4294901760
    %v561 = vsub.f32 %v559, %v560
    %v562 = vand.u32 %v561, 4294901760
    %563 = vmatpush.msra.mxu0 %v562
    %v564 = vand.u32 %v440, 4294901760
    %v565 = vsub.f32 %v440, %v564
    %v566 = vand.u32 %v565, 4294901760
    %v567 = vsub.f32 %v565, %v566
    %v568 = vand.u32 %v567, 4294901760
    %569 = vmatpush.msra.mxu0 %v568
    %v570 = vand.u32 %v439, 4294901760
    %v571 = vsub.f32 %v439, %v570
    %v572 = vand.u32 %v571, 4294901760
    %v573 = vsub.f32 %v571, %v572
    %v574 = vand.u32 %v573, 4294901760
    %575 = vmatpush.msra.mxu0 %v574
    %v576 = vand.u32 %v438, 4294901760
    %v577 = vsub.f32 %v438, %v576
    %v578 = vand.u32 %v577, 4294901760
    %v579 = vsub.f32 %v577, %v578
    %v580 = vand.u32 %v579, 4294901760
    %581 = vmatpush.msra.mxu0 %v580
    %v582 = vand.u32 %v437, 4294901760
    %v583 = vsub.f32 %v437, %v582
    %v584 = vand.u32 %v583, 4294901760
    %v585 = vsub.f32 %v583, %v584
    %v586 = vand.u32 %v585, 4294901760
    %587 = vmatpush.msra.mxu0 %v586
    %v588 = vand.u32 %v436, 4294901760
    %v589 = vsub.f32 %v436, %v588
    %v590 = vand.u32 %v589, 4294901760
    %v591 = vsub.f32 %v589, %v590
    %v592 = vand.u32 %v591, 4294901760
    %593 = vmatpush.msra.mxu0 %v592
    %v594 = vand.u32 %v434, 4294901760
    %595 = vmatmul.f32.gmra.mxu0 %v594
    %v596 = vpop.f32.mrf.mxu0
    %v597 = vadd.f32 %v496, %v596
    %598 = vdwg.mxu0
    %v599 = vand.u32 %v451, 4294901760
    %v600 = vsub.f32 %v451, %v599
    %601 = vmatpush.msra.mxu0 %v600
    %v602 = vand.u32 %v450, 4294901760
    %v603 = vsub.f32 %v450, %v602
    %604 = vmatpush.msra.mxu0 %v603
    %v605 = vand.u32 %v449, 4294901760
    %v606 = vsub.f32 %v449, %v605
    %607 = vmatpush.msra.mxu0 %v606
    %v608 = vand.u32 %v448, 4294901760
    %v609 = vsub.f32 %v448, %v608
    %610 = vmatpush.msra.mxu0 %v609
    %v611 = vand.u32 %v447, 4294901760
    %v612 = vsub.f32 %v447, %v611
    %613 = vmatpush.msra.mxu0 %v612
    %v614 = vand.u32 %v446, 4294901760
    %v615 = vsub.f32 %v446, %v614
    %616 = vmatpush.msra.mxu0 %v615
    %v617 = vand.u32 %v445, 4294901760
    %v618 = vsub.f32 %v445, %v617
    %619 = vmatpush.msra.mxu0 %v618
    %v620 = vand.u32 %v444, 4294901760
    %v621 = vsub.f32 %v444, %v620
    %622 = vmatpush.msra.mxu0 %v621
    %v623 = vand.u32 %v443, 4294901760
    %v624 = vsub.f32 %v443, %v623
    %625 = vmatpush.msra.mxu0 %v624
    %v626 = vand.u32 %v442, 4294901760
    %v627 = vsub.f32 %v442, %v626
    %628 = vmatpush.msra.mxu0 %v627
    %v629 = vand.u32 %v441, 4294901760
    %v630 = vsub.f32 %v441, %v629
    %631 = vmatpush.msra.mxu0 %v630
    %v632 = vand.u32 %v440, 4294901760
    %v633 = vsub.f32 %v440, %v632
    %634 = vmatpush.msra.mxu0 %v633
    %v635 = vand.u32 %v439, 4294901760
    %v636 = vsub.f32 %v439, %v635
    %637 = vmatpush.msra.mxu0 %v636
    %v638 = vand.u32 %v438, 4294901760
    %v639 = vsub.f32 %v438, %v638
    %640 = vmatpush.msra.mxu0 %v639
    %v641 = vand.u32 %v437, 4294901760
    %v642 = vsub.f32 %v437, %v641
    %643 = vmatpush.msra.mxu0 %v642
    %v644 = vand.u32 %v436, 4294901760
    %v645 = vsub.f32 %v436, %v644
    %646 = vmatpush.msra.mxu0 %v645
    %v647 = vand.u32 %v434, 4294901760
    %v648 = vsub.f32 %v434, %v647
    %649 = vmatmul.f32.gmra.mxu0 %v648
    %v650 = vpop.f32.mrf.mxu0
    %v651 = vadd.f32 %v597, %v650
    %652 = vdwg.mxu0
    %v653 = vand.u32 %v451, 4294901760
    %654 = vmatpush.msra.mxu0 %v653
    %v655 = vand.u32 %v450, 4294901760
    %656 = vmatpush.msra.mxu0 %v655
    %v657 = vand.u32 %v449, 4294901760
    %658 = vmatpush.msra.mxu0 %v657
    %v659 = vand.u32 %v448, 4294901760
    %660 = vmatpush.msra.mxu0 %v659
    %v661 = vand.u32 %v447, 4294901760
    %662 = vmatpush.msra.mxu0 %v661
    %v663 = vand.u32 %v446, 4294901760
    %664 = vmatpush.msra.mxu0 %v663
    %v665 = vand.u32 %v445, 4294901760
    %666 = vmatpush.msra.mxu0 %v665
    %v667 = vand.u32 %v444, 4294901760
    %668 = vmatpush.msra.mxu0 %v667
    %v669 = vand.u32 %v443, 4294901760
    %670 = vmatpush.msra.mxu0 %v669
    %v671 = vand.u32 %v442, 4294901760
    %672 = vmatpush.msra.mxu0 %v671
    %v673 = vand.u32 %v441, 4294901760
    %674 = vmatpush.msra.mxu0 %v673
    %v675 = vand.u32 %v440, 4294901760
    %676 = vmatpush.msra.mxu0 %v675
    %v677 = vand.u32 %v439, 4294901760
    %678 = vmatpush.msra.mxu0 %v677
    %v679 = vand.u32 %v438, 4294901760
    %680 = vmatpush.msra.mxu0 %v679
    %v681 = vand.u32 %v437, 4294901760
    %682 = vmatpush.msra.mxu0 %v681
    %v683 = vand.u32 %v436, 4294901760
    %684 = vmatpush.msra.mxu0 %v683
    %v685 = vand.u32 %v434, 4294901760
    %v686 = vsub.f32 %v434, %v685
    %v687 = vand.u32 %v686, 4294901760
    %688 = vmatmul.f32.gmra.mxu0 %v687
    %v689 = vpop.f32.mrf.mxu0
    %v690 = vadd.f32 %v651, %v689
    %691 = vdwg.mxu0
    %v692 = vand.u32 %v451, 4294901760
    %v693 = vsub.f32 %v451, %v692
    %v694 = vand.u32 %v693, 4294901760
    %695 = vmatpush.msra.mxu0 %v694
    %v696 = vand.u32 %v450, 4294901760
    %v697 = vsub.f32 %v450, %v696
    %v698 = vand.u32 %v697, 4294901760
    %699 = vmatpush.msra.mxu0 %v698
    %v700 = vand.u32 %v449, 4294901760
    %v701 = vsub.f32 %v449, %v700
    %v702 = vand.u32 %v701, 4294901760
    %703 = vmatpush.msra.mxu0 %v702
    %v704 = vand.u32 %v448, 4294901760
    %v705 = vsub.f32 %v448, %v704
    %v706 = vand.u32 %v705, 4294901760
    %707 = vmatpush.msra.mxu0 %v706
    %v708 = vand.u32 %v447, 4294901760
    %v709 = vsub.f32 %v447, %v708
    %v710 = vand.u32 %v709, 4294901760
    %711 = vmatpush.msra.mxu0 %v710
    %v712 = vand.u32 %v446, 4294901760
    %v713 = vsub.f32 %v446, %v712
    %v714 = vand.u32 %v713, 4294901760
    %715 = vmatpush.msra.mxu0 %v714
    %v716 = vand.u32 %v445, 4294901760
    %v717 = vsub.f32 %v445, %v716
    %v718 = vand.u32 %v717, 4294901760
    %719 = vmatpush.msra.mxu0 %v718
    %v720 = vand.u32 %v444, 4294901760
    %v721 = vsub.f32 %v444, %v720
    %v722 = vand.u32 %v721, 4294901760
    %723 = vmatpush.msra.mxu0 %v722
    %v724 = vand.u32 %v443, 4294901760
    %v725 = vsub.f32 %v443, %v724
    %v726 = vand.u32 %v725, 4294901760
    %727 = vmatpush.msra.mxu0 %v726
    %v728 = vand.u32 %v442, 4294901760
    %v729 = vsub.f32 %v442, %v728
    %v730 = vand.u32 %v729, 4294901760
    %731 = vmatpush.msra.mxu0 %v730
    %v732 = vand.u32 %v441, 4294901760
    %v733 = vsub.f32 %v441, %v732
    %v734 = vand.u32 %v733, 4294901760
    %735 = vmatpush.msra.mxu0 %v734
    %v736 = vand.u32 %v440, 4294901760
    %v737 = vsub.f32 %v440, %v736
    %v738 = vand.u32 %v737, 4294901760
    %739 = vmatpush.msra.mxu0 %v738
    %v740 = vand.u32 %v439, 4294901760
    %v741 = vsub.f32 %v439, %v740
    %v742 = vand.u32 %v741, 4294901760
    %743 = vmatpush.msra.mxu0 %v742
    %v744 = vand.u32 %v438, 4294901760
    %v745 = vsub.f32 %v438, %v744
    %v746 = vand.u32 %v745, 4294901760
    %747 = vmatpush.msra.mxu0 %v746
    %v748 = vand.u32 %v437, 4294901760
    %v749 = vsub.f32 %v437, %v748
    %v750 = vand.u32 %v749, 4294901760
    %751 = vmatpush.msra.mxu0 %v750
    %v752 = vand.u32 %v436, 4294901760
    %v753 = vsub.f32 %v436, %v752
    %v754 = vand.u32 %v753, 4294901760
    %755 = vmatpush.msra.mxu0 %v754
    %v756 = vand.u32 %v434, 4294901760
    %757 = vmatmul.f32.gmra.mxu0 %v756
    %v758 = vpop.f32.mrf.mxu0
    %v759 = vadd.f32 %v690, %v758
    %760 = vdwg.mxu0
    %v761 = vand.u32 %v451, 4294901760
    %762 = vmatpush.msra.mxu0 %v761
    %v763 = vand.u32 %v450, 4294901760
    %764 = vmatpush.msra.mxu0 %v763
    %v765 = vand.u32 %v449, 4294901760
    %766 = vmatpush.msra.mxu0 %v765
    %v767 = vand.u32 %v448, 4294901760
    %768 = vmatpush.msra.mxu0 %v767
    %v769 = vand.u32 %v447, 4294901760
    %770 = vmatpush.msra.mxu0 %v769
    %v771 = vand.u32 %v446, 4294901760
    %772 = vmatpush.msra.mxu0 %v771
    %v773 = vand.u32 %v445, 4294901760
    %774 = vmatpush.msra.mxu0 %v773
    %v775 = vand.u32 %v444, 4294901760
    %776 = vmatpush.msra.mxu0 %v775
    %v777 = vand.u32 %v443, 4294901760
    %778 = vmatpush.msra.mxu0 %v777
    %v779 = vand.u32 %v442, 4294901760
    %780 = vmatpush.msra.mxu0 %v779
    %v781 = vand.u32 %v441, 4294901760
    %782 = vmatpush.msra.mxu0 %v781
    %v783 = vand.u32 %v440, 4294901760
    %784 = vmatpush.msra.mxu0 %v783
    %v785 = vand.u32 %v439, 4294901760
    %786 = vmatpush.msra.mxu0 %v785
    %v787 = vand.u32 %v438, 4294901760
    %788 = vmatpush.msra.mxu0 %v787
    %v789 = vand.u32 %v437, 4294901760
    %790 = vmatpush.msra.mxu0 %v789
    %v791 = vand.u32 %v436, 4294901760
    %792 = vmatpush.msra.mxu0 %v791
    %v793 = vand.u32 %v434, 4294901760
    %794 = vmatmul.f32.gmra.mxu0 %v793
    %v795 = vpop.f32.mrf.mxu0
    %v796 = vadd.f32 %v759, %v795
    %797 = vdwg.mxu0
    %v798 = vmul.f32 %v796, %v796
    %v799 = vmul.f32 %v798, 0.035677407
    %v800 = vadd.f32 %v799, 0.7978846
    %v801 = vmul.f32 %v796, %v800
    %v802 = vmul.f32 %v796, 0.5
    %v803 = vtanh.pop %v801
    %v804 = vadd.f32 %v803, 1.0
    %v805 = vmul.f32 %v802, %v804
    %v806 = vadd.f32 %v434, %v805
    %s807 = scalar_lea.vmem [#allocation6], 256
    %v808 = vld [vmem:[%s807] sm:$0xff]
    %v809 = vld [vmem:[%s807 + $0x8] sm:$0xff]
    %v810 = vld [vmem:[%s807 + $0x10] sm:$0xff]
    %v811 = vld [vmem:[%s807 + $0x18] sm:$0xff]
    %v812 = vld [vmem:[%s807 + $0x20] sm:$0xff]
    %v813 = vld [vmem:[%s807 + $0x28] sm:$0xff]
    %v814 = vld [vmem:[%s807 + $0x30] sm:$0xff]
    %v815 = vld [vmem:[%s807 + $0x38] sm:$0xff]
    %v816 = vld [vmem:[%s807 + $0x40] sm:$0xff]
    %v817 = vld [vmem:[%s807 + $0x48] sm:$0xff]
    %v818 = vld [vmem:[%s807 + $0x50] sm:$0xff]
    %v819 = vld [vmem:[%s807 + $0x58] sm:$0xff]
    %v820 = vld [vmem:[%s807 + $0x60] sm:$0xff]
    %v821 = vld [vmem:[%s807 + $0x68] sm:$0xff]
    %v822 = vld [vmem:[%s807 + $0x70] sm:$0xff]
    %v823 = vld [vmem:[%s807 + $0x78] sm:$0xff]
    %s824 = scalar_lea.vmem [#allocation8], 2
    %v825 = vld [vmem:[%s824] sm:$0x1]
    %v827 = vperm.slane %v825, 0
    %v829 = vand.u32 %v823, 4294901760
    %830 = vmatpush.msra.mxu0 %v829
    %v831 = vand.u32 %v822, 4294901760
    %832 = vmatpush.msra.mxu0 %v831
    %v833 = vand.u32 %v821, 4294901760
    %834 = vmatpush.msra.mxu0 %v833
    %v835 = vand.u32 %v820, 4294901760
    %836 = vmatpush.msra.mxu0 %v835
    %v837 = vand.u32 %v819, 4294901760
    %838 = vmatpush.msra.mxu0 %v837
    %v839 = vand.u32 %v818, 4294901760
    %840 = vmatpush.msra.mxu0 %v839
    %v841 = vand.u32 %v817, 4294901760
    %842 = vmatpush.msra.mxu0 %v841
    %v843 = vand.u32 %v816, 4294901760
    %844 = vmatpush.msra.mxu0 %v843
    %v845 = vand.u32 %v815, 4294901760
    %846 = vmatpush.msra.mxu0 %v845
    %v847 = vand.u32 %v814, 4294901760
    %848 = vmatpush.msra.mxu0 %v847
    %v849 = vand.u32 %v813, 4294901760
    %850 = vmatpush.msra.mxu0 %v849
    %v851 = vand.u32 %v812, 4294901760
    %852 = vmatpush.msra.mxu0 %v851
    %v853 = vand.u32 %v811, 4294901760
    %854 = vmatpush.msra.mxu0 %v853
    %v855 = vand.u32 %v810, 4294901760
    %856 = vmatpush.msra.mxu0 %v855
    %v857 = vand.u32 %v809, 4294901760
    %858 = vmatpush.msra.mxu0 %v857
    %v859 = vand.u32 %v808, 4294901760
    %860 = vmatpush.msra.mxu0 %v859
    %v861 = vand.u32 %v806, 4294901760
    %v862 = vsub.f32 %v806, %v861
    %v863 = vand.u32 %v862, 4294901760
    %v864 = vsub.f32 %v862, %v863
    %v865 = vand.u32 %v864, 4294901760
    %866 = vmatmul.f32.gmra.mxu0 %v865
    %v867 = vpop.f32.mrf.mxu0
    %v868 = vadd.f32 %v827, %v867
    %869 = vdwg.mxu0
    %v870 = vand.u32 %v823, 4294901760
    %v871 = vsub.f32 %v823, %v870
    %v872 = vand.u32 %v871, 4294901760
    %v873 = vsub.f32 %v871, %v872
    %v874 = vand.u32 %v873, 4294901760
    %875 = vmatpush.msra.mxu0 %v874
    %v876 = vand.u32 %v822, 4294901760
    %v877 = vsub.f32 %v822, %v876
    %v878 = vand.u32 %v877, 4294901760
    %v879 = vsub.f32 %v877, %v878
    %v880 = vand.u32 %v879, 4294901760
    %881 = vmatpush.msra.mxu0 %v880
    %v882 = vand.u32 %v821, 4294901760
    %v883 = vsub.f32 %v821, %v882
    %v884 = vand.u32 %v883, 4294901760
    %v885 = vsub.f32 %v883, %v884
    %v886 = vand.u32 %v885, 4294901760
    %887 = vmatpush.msra.mxu0 %v886
    %v888 = vand.u32 %v820, 4294901760
    %v889 = vsub.f32 %v820, %v888
    %v890 = vand.u32 %v889, 4294901760
    %v891 = vsub.f32 %v889, %v890
    %v892 = vand.u32 %v891, 4294901760
    %893 = vmatpush.msra.mxu0 %v892
    %v894 = vand.u32 %v819, 4294901760
    %v895 = vsub.f32 %v819, %v894
    %v896 = vand.u32 %v895, 4294901760
    %v897 = vsub.f32 %v895, %v896
    %v898 = vand.u32 %v897, 4294901760
    %899 = vmatpush.msra.mxu0 %v898
    %v900 = vand.u32 %v818, 4294901760
    %v901 = vsub.f32 %v818, %v900
    %v902 = vand.u32 %v901, 4294901760
    %v903 = vsub.f32 %v901, %v902
    %v904 = vand.u32 %v903, 4294901760
    %905 = vmatpush.msra.mxu0 %v904
    %v906 = vand.u32 %v817, 4294901760
    %v907 = vsub.f32 %v817, %v906
    %v908 = vand.u32 %v907, 4294901760
    %v909 = vsub.f32 %v907, %v908
    %v910 = vand.u32 %v909, 4294901760
    %911 = vmatpush.msra.mxu0 %v910
    %v912 = vand.u32 %v816, 4294901760
    %v913 = vsub.f32 %v816, %v912
    %v914 = vand.u32 %v913, 4294901760
    %v915 = vsub.f32 %v913, %v914
    %v916 = vand.u32 %v915, 4294901760
    %917 = vmatpush.msra.mxu0 %v916
    %v918 = vand.u32 %v815, 4294901760
    %v919 = vsub.f32 %v815, %v918
    %v920 = vand.u32 %v919, 4294901760
    %v921 = vsub.f32 %v919, %v920
    %v922 = vand.u32 %v921, 4294901760
    %923 = vmatpush.msra.mxu0 %v922
    %v924 = vand.u32 %v814, 4294901760
    %v925 = vsub.f32 %v814, %v924
    %v926 = vand.u32 %v925, 4294901760
    %v927 = vsub.f32 %v925, %v926
    %v928 = vand.u32 %v927, 4294901760
    %929 = vmatpush.msra.mxu0 %v928
    %v930 = vand.u32 %v813, 4294901760
    %v931 = vsub.f32 %v813, %v930
    %v932 = vand.u32 %v931, 4294901760
    %v933 = vsub.f32 %v931, %v932
    %v934 = vand.u32 %v933, 4294901760
    %935 = vmatpush.msra.mxu0 %v934
    %v936 = vand.u32 %v812, 4294901760
    %v937 = vsub.f32 %v812, %v936
    %v938 = vand.u32 %v937, 4294901760
    %v939 = vsub.f32 %v937, %v938
    %v940 = vand.u32 %v939, 4294901760
    %941 = vmatpush.msra.mxu0 %v940
    %v942 = vand.u32 %v811, 4294901760
    %v943 = vsub.f32 %v811, %v942
    %v944 = vand.u32 %v943, 4294901760
    %v945 = vsub.f32 %v943, %v944
    %v946 = vand.u32 %v945, 4294901760
    %947 = vmatpush.msra.mxu0 %v946
    %v948 = vand.u32 %v810, 4294901760
    %v949 = vsub.f32 %v810, %v948
    %v950 = vand.u32 %v949, 4294901760
    %v951 = vsub.f32 %v949, %v950
    %v952 = vand.u32 %v951, 4294901760
    %953 = vmatpush.msra.mxu0 %v952
    %v954 = vand.u32 %v809, 4294901760
    %v955 = vsub.f32 %v809, %v954
    %v956 = vand.u32 %v955, 4294901760
    %v957 = vsub.f32 %v955, %v956
    %v958 = vand.u32 %v957, 4294901760
    %959 = vmatpush.msra.mxu0 %v958
    %v960 = vand.u32 %v808, 4294901760
    %v961 = vsub.f32 %v808, %v960
    %v962 = vand.u32 %v961, 4294901760
    %v963 = vsub.f32 %v961, %v962
    %v964 = vand.u32 %v963, 4294901760
    %965 = vmatpush.msra.mxu0 %v964
    %v966 = vand.u32 %v806, 4294901760
    %967 = vmatmul.f32.gmra.mxu0 %v966
    %v968 = vpop.f32.mrf.mxu0
    %v969 = vadd.f32 %v868, %v968
    %970 = vdwg.mxu0
    %v971 = vand.u32 %v823, 4294901760
    %v972 = vsub.f32 %v823, %v971
    %973 = vmatpush.msra.mxu0 %v972
    %v974 = vand.u32 %v822, 4294901760
    %v975 = vsub.f32 %v822, %v974
    %976 = vmatpush.msra.mxu0 %v975
    %v977 = vand.u32 %v821, 4294901760
    %v978 = vsub.f32 %v821, %v977
    %979 = vmatpush.msra.mxu0 %v978
    %v980 = vand.u32 %v820, 4294901760
    %v981 = vsub.f32 %v820, %v980
    %982 = vmatpush.msra.mxu0 %v981
    %v983 = vand.u32 %v819, 4294901760
    %v984 = vsub.f32 %v819, %v983
    %985 = vmatpush.msra.mxu0 %v984
    %v986 = vand.u32 %v818, 4294901760
    %v987 = vsub.f32 %v818, %v986
    %988 = vmatpush.msra.mxu0 %v987
    %v989 = vand.u32 %v817, 4294901760
    %v990 = vsub.f32 %v817, %v989
    %991 = vmatpush.msra.mxu0 %v990
    %v992 = vand.u32 %v816, 4294901760
    %v993 = vsub.f32 %v816, %v992
    %994 = vmatpush.msra.mxu0 %v993
    %v995 = vand.u32 %v815, 4294901760
    %v996 = vsub.f32 %v815, %v995
    %997 = vmatpush.msra.mxu0 %v996
    %v998 = vand.u32 %v814, 4294901760
    %v999 = vsub.f32 %v814, %v998
    %1000 = vmatpush.msra.mxu0 %v999
    %v1001 = vand.u32 %v813, 4294901760
    %v1002 = vsub.f32 %v813, %v1001
    %1003 = vmatpush.msra.mxu0 %v1002
    %v1004 = vand.u32 %v812, 4294901760
    %v1005 = vsub.f32 %v812, %v1004
    %1006 = vmatpush.msra.mxu0 %v1005
    %v1007 = vand.u32 %v811, 4294901760
    %v1008 = vsub.f32 %v811, %v1007
    %1009 = vmatpush.msra.mxu0 %v1008
    %v1010 = vand.u32 %v810, 4294901760
    %v1011 = vsub.f32 %v810, %v1010
    %1012 = vmatpush.msra.mxu0 %v1011
    %v1013 = vand.u32 %v809, 4294901760
    %v1014 = vsub.f32 %v809, %v1013
    %1015 = vmatpush.msra.mxu0 %v1014
    %v1016 = vand.u32 %v808, 4294901760
    %v1017 = vsub.f32 %v808, %v1016
    %1018 = vmatpush.msra.mxu0 %v1017
    %v1019 = vand.u32 %v806, 4294901760
    %v1020 = vsub.f32 %v806, %v1019
    %1021 = vmatmul.f32.gmra.mxu0 %v1020
    %v1022 = vpop.f32.mrf.mxu0
    %v1023 = vadd.f32 %v969, %v1022
    %1024 = vdwg.mxu0
    %v1025 = vand.u32 %v823, 4294901760
    %1026 = vmatpush.msra.mxu0 %v1025
    %v1027 = vand.u32 %v822, 4294901760
    %1028 = vmatpush.msra.mxu0 %v1027
    %v1029 = vand.u32 %v821, 4294901760
    %1030 = vmatpush.msra.mxu0 %v1029
    %v1031 = vand.u32 %v820, 4294901760
    %1032 = vmatpush.msra.mxu0 %v1031
    %v1033 = vand.u32 %v819, 4294901760
    %1034 = vmatpush.msra.mxu0 %v1033
    %v1035 = vand.u32 %v818, 4294901760
    %1036 = vmatpush.msra.mxu0 %v1035
    %v1037 = vand.u32 %v817, 4294901760
    %1038 = vmatpush.msra.mxu0 %v1037
    %v1039 = vand.u32 %v816, 4294901760
    %1040 = vmatpush.msra.mxu0 %v1039
    %v1041 = vand.u32 %v815, 4294901760
    %1042 = vmatpush.msra.mxu0 %v1041
    %v1043 = vand.u32 %v814, 4294901760
    %1044 = vmatpush.msra.mxu0 %v1043
    %v1045 = vand.u32 %v813, 4294901760
    %1046 = vmatpush.msra.mxu0 %v1045
    %v1047 = vand.u32 %v812, 4294901760
    %1048 = vmatpush.msra.mxu0 %v1047
    %v1049 = vand.u32 %v811, 4294901760
    %1050 = vmatpush.msra.mxu0 %v1049
    %v1051 = vand.u32 %v810, 4294901760
    %1052 = vmatpush.msra.mxu0 %v1051
    %v1053 = vand.u32 %v809, 4294901760
    %1054 = vmatpush.msra.mxu0 %v1053
    %v1055 = vand.u32 %v808, 4294901760
    %1056 = vmatpush.msra.mxu0 %v1055
    %v1057 = vand.u32 %v806, 4294901760
    %v1058 = vsub.f32 %v806, %v1057
    %v1059 = vand.u32 %v1058, 4294901760
    %1060 = vmatmul.f32.gmra.mxu0 %v1059
    %v1061 = vpop.f32.mrf.mxu0
    %v1062 = vadd.f32 %v1023, %v1061
    %1063 = vdwg.mxu0
    %v1064 = vand.u32 %v823, 4294901760
    %v1065 = vsub.f32 %v823, %v1064
    %v1066 = vand.u32 %v1065, 4294901760
    %1067 = vmatpush.msra.mxu0 %v1066
    %v1068 = vand.u32 %v822, 4294901760
    %v1069 = vsub.f32 %v822, %v1068
    %v1070 = vand.u32 %v1069, 4294901760
    %1071 = vmatpush.msra.mxu0 %v1070
    %v1072 = vand.u32 %v821, 4294901760
    %v1073 = vsub.f32 %v821, %v1072
    %v1074 = vand.u32 %v1073, 4294901760
    %1075 = vmatpush.msra.mxu0 %v1074
    %v1076 = vand.u32 %v820, 4294901760
    %v1077 = vsub.f32 %v820, %v1076
    %v1078 = vand.u32 %v1077, 4294901760
    %1079 = vmatpush.msra.mxu0 %v1078
    %v1080 = vand.u32 %v819, 4294901760
    %v1081 = vsub.f32 %v819, %v1080
    %v1082 = vand.u32 %v1081, 4294901760
    %1083 = vmatpush.msra.mxu0 %v1082
    %v1084 = vand.u32 %v818, 4294901760
    %v1085 = vsub.f32 %v818, %v1084
    %v1086 = vand.u32 %v1085, 4294901760
    %1087 = vmatpush.msra.mxu0 %v1086
    %v1088 = vand.u32 %v817, 4294901760
    %v1089 = vsub.f32 %v817, %v1088
    %v1090 = vand.u32 %v1089, 4294901760
    %1091 = vmatpush.msra.mxu0 %v1090
    %v1092 = vand.u32 %v816, 4294901760
    %v1093 = vsub.f32 %v816, %v1092
    %v1094 = vand.u32 %v1093, 4294901760
    %1095 = vmatpush.msra.mxu0 %v1094
    %v1096 = vand.u32 %v815, 4294901760
    %v1097 = vsub.f32 %v815, %v1096
    %v1098 = vand.u32 %v1097, 4294901760
    %1099 = vmatpush.msra.mxu0 %v1098
    %v1100 = vand.u32 %v814, 4294901760
    %v1101 = vsub.f32 %v814, %v1100
    %v1102 = vand.u32 %v1101, 4294901760
    %1103 = vmatpush.msra.mxu0 %v1102
    %v1104 = vand.u32 %v813, 4294901760
    %v1105 = vsub.f32 %v813, %v1104
    %v1106 = vand.u32 %v1105, 4294901760
    %1107 = vmatpush.msra.mxu0 %v1106
    %v1108 = vand.u32 %v812, 4294901760
    %v1109 = vsub.f32 %v812, %v1108
    %v1110 = vand.u32 %v1109, 4294901760
    %1111 = vmatpush.msra.mxu0 %v1110
    %v1112 = vand.u32 %v811, 4294901760
    %v1113 = vsub.f32 %v811, %v1112
    %v1114 = vand.u32 %v1113, 4294901760
    %1115 = vmatpush.msra.mxu0 %v1114
    %v1116 = vand.u32 %v810, 4294901760
    %v1117 = vsub.f32 %v810, %v1116
    %v1118 = vand.u32 %v1117, 4294901760
    %1119 = vmatpush.msra.mxu0 %v1118
    %v1120 = vand.u32 %v809, 4294901760
    %v1121 = vsub.f32 %v809, %v1120
    %v1122 = vand.u32 %v1121, 4294901760
    %1123 = vmatpush.msra.mxu0 %v1122
    %v1124 = vand.u32 %v808, 4294901760
    %v1125 = vsub.f32 %v808, %v1124
    %v1126 = vand.u32 %v1125, 4294901760
    %1127 = vmatpush.msra.mxu0 %v1126
    %v1128 = vand.u32 %v806, 4294901760
    %1129 = vmatmul.f32.gmra.mxu0 %v1128
    %v1130 = vpop.f32.mrf.mxu0
    %v1131 = vadd.f32 %v1062, %v1130
    %1132 = vdwg.mxu0
    %v1133 = vand.u32 %v823, 4294901760
    %1134 = vmatpush.msra.mxu0 %v1133
    %v1135 = vand.u32 %v822, 4294901760
    %1136 = vmatpush.msra.mxu0 %v1135
    %v1137 = vand.u32 %v821, 4294901760
    %1138 = vmatpush.msra.mxu0 %v1137
    %v1139 = vand.u32 %v820, 4294901760
    %1140 = vmatpush.msra.mxu0 %v1139
    %v1141 = vand.u32 %v819, 4294901760
    %1142 = vmatpush.msra.mxu0 %v1141
    %v1143 = vand.u32 %v818, 4294901760
    %1144 = vmatpush.msra.mxu0 %v1143
    %v1145 = vand.u32 %v817, 4294901760
    %1146 = vmatpush.msra.mxu0 %v1145
    %v1147 = vand.u32 %v816, 4294901760
    %1148 = vmatpush.msra.mxu0 %v1147
    %v1149 = vand.u32 %v815, 4294901760
    %1150 = vmatpush.msra.mxu0 %v1149
    %v1151 = vand.u32 %v814, 4294901760
    %1152 = vmatpush.msra.mxu0 %v1151
    %v1153 = vand.u32 %v813, 4294901760
    %1154 = vmatpush.msra.mxu0 %v1153
    %v1155 = vand.u32 %v812, 4294901760
    %1156 = vmatpush.msra.mxu0 %v1155
    %v1157 = vand.u32 %v811, 4294901760
    %1158 = vmatpush.msra.mxu0 %v1157
    %v1159 = vand.u32 %v810, 4294901760
    %1160 = vmatpush.msra.mxu0 %v1159
    %v1161 = vand.u32 %v809, 4294901760
    %1162 = vmatpush.msra.mxu0 %v1161
    %v1163 = vand.u32 %v808, 4294901760
    %1164 = vmatpush.msra.mxu0 %v1163
    %v1165 = vand.u32 %v806, 4294901760
    %1166 = vmatmul.f32.gmra.mxu0 %v1165
    %v1167 = vpop.f32.mrf.mxu0
    %v1168 = vadd.f32 %v1131, %v1167
    %1169 = vdwg.mxu0
    %v1170 = vmul.f32 %v1168, %v1168
    %v1171 = vmul.f32 %v1170, 0.035677407
    %v1172 = vadd.f32 %v1171, 0.7978846
    %v1173 = vmul.f32 %v1168, %v1172
    %v1174 = vmul.f32 %v1168, 0.5
    %v1175 = vtanh.pop %v1173
    %v1176 = vadd.f32 %v1175, 1.0
    %v1177 = vmul.f32 %v1174, %v1176
    %v1178 = vadd.f32 %v806, %v1177
    %s1179 = scalar_lea.vmem [#allocation6], 384
    %v1180 = vld [vmem:[%s1179] sm:$0xff]
    %v1181 = vld [vmem:[%s1179 + $0x8] sm:$0xff]
    %v1182 = vld [vmem:[%s1179 + $0x10] sm:$0xff]
    %v1183 = vld [vmem:[%s1179 + $0x18] sm:$0xff]
    %v1184 = vld [vmem:[%s1179 + $0x20] sm:$0xff]
    %v1185 = vld [vmem:[%s1179 + $0x28] sm:$0xff]
    %v1186 = vld [vmem:[%s1179 + $0x30] sm:$0xff]
    %v1187 = vld [vmem:[%s1179 + $0x38] sm:$0xff]
    %v1188 = vld [vmem:[%s1179 + $0x40] sm:$0xff]
    %v1189 = vld [vmem:[%s1179 + $0x48] sm:$0xff]
    %v1190 = vld [vmem:[%s1179 + $0x50] sm:$0xff]
    %v1191 = vld [vmem:[%s1179 + $0x58] sm:$0xff]
    %v1192 = vld [vmem:[%s1179 + $0x60] sm:$0xff]
    %v1193 = vld [vmem:[%s1179 + $0x68] sm:$0xff]
    %v1194 = vld [vmem:[%s1179 + $0x70] sm:$0xff]
    %v1195 = vld [vmem:[%s1179 + $0x78] sm:$0xff]
    %s1196 = scalar_lea.vmem [#allocation8], 3
    %v1197 = vld [vmem:[%s1196] sm:$0x1]
    %v1199 = vperm.slane %v1197, 0
    %v1201 = vand.u32 %v1195, 4294901760
    %1202 = vmatpush.msra.mxu0 %v1201
    %v1203 = vand.u32 %v1194, 4294901760
    %1204 = vmatpush.msra.mxu0 %v1203
    %v1205 = vand.u32 %v1193, 4294901760
    %1206 = vmatpush.msra.mxu0 %v1205
    %v1207 = vand.u32 %v1192, 4294901760
    %1208 = vmatpush.msra.mxu0 %v1207
    %v1209 = vand.u32 %v1191, 4294901760
    %1210 = vmatpush.msra.mxu0 %v1209
    %v1211 = vand.u32 %v1190, 4294901760
    %1212 = vmatpush.msra.mxu0 %v1211
    %v1213 = vand.u32 %v1189, 4294901760
    %1214 = vmatpush.msra.mxu0 %v1213
    %v1215 = vand.u32 %v1188, 4294901760
    %1216 = vmatpush.msra.mxu0 %v1215
    %v1217 = vand.u32 %v1187, 4294901760
    %1218 = vmatpush.msra.mxu0 %v1217
    %v1219 = vand.u32 %v1186, 4294901760
    %1220 = vmatpush.msra.mxu0 %v1219
    %v1221 = vand.u32 %v1185, 4294901760
    %1222 = vmatpush.msra.mxu0 %v1221
    %v1223 = vand.u32 %v1184, 4294901760
    %1224 = vmatpush.msra.mxu0 %v1223
    %v1225 = vand.u32 %v1183, 4294901760
    %1226 = vmatpush.msra.mxu0 %v1225
    %v1227 = vand.u32 %v1182, 4294901760
    %1228 = vmatpush.msra.mxu0 %v1227
    %v1229 = vand.u32 %v1181, 4294901760
    %1230 = vmatpush.msra.mxu0 %v1229
    %v1231 = vand.u32 %v1180, 4294901760
    %1232 = vmatpush.msra.mxu0 %v1231
    %v1233 = vand.u32 %v1178, 4294901760
    %v1234 = vsub.f32 %v1178, %v1233
    %v1235 = vand.u32 %v1234, 4294901760
    %v1236 = vsub.f32 %v1234, %v1235
    %v1237 = vand.u32 %v1236, 4294901760
    %1238 = vmatmul.f32.gmra.mxu0 %v1237
    %v1239 = vpop.f32.mrf.mxu0
    %v1240 = vadd.f32 %v1199, %v1239
    %1241 = vdwg.mxu0
    %v1242 = vand.u32 %v1195, 4294901760
    %v1243 = vsub.f32 %v1195, %v1242
    %v1244 = vand.u32 %v1243, 4294901760
    %v1245 = vsub.f32 %v1243, %v1244
    %v1246 = vand.u32 %v1245, 4294901760
    %1247 = vmatpush.msra.mxu0 %v1246
    %v1248 = vand.u32 %v1194, 4294901760
    %v1249 = vsub.f32 %v1194, %v1248
    %v1250 = vand.u32 %v1249, 4294901760
    %v1251 = vsub.f32 %v1249, %v1250
    %v1252 = vand.u32 %v1251, 4294901760
    %1253 = vmatpush.msra.mxu0 %v1252
    %v1254 = vand.u32 %v1193, 4294901760
    %v1255 = vsub.f32 %v1193, %v1254
    %v1256 = vand.u32 %v1255, 4294901760
    %v1257 = vsub.f32 %v1255, %v1256
    %v1258 = vand.u32 %v1257, 4294901760
    %1259 = vmatpush.msra.mxu0 %v1258
    %v1260 = vand.u32 %v1192, 4294901760
    %v1261 = vsub.f32 %v1192, %v1260
    %v1262 = vand.u32 %v1261, 4294901760
    %v1263 = vsub.f32 %v1261, %v1262
    %v1264 = vand.u32 %v1263, 4294901760
    %1265 = vmatpush.msra.mxu0 %v1264
    %v1266 = vand.u32 %v1191, 4294901760
    %v1267 = vsub.f32 %v1191, %v1266
    %v1268 = vand.u32 %v1267, 4294901760
    %v1269 = vsub.f32 %v1267, %v1268
    %v1270 = vand.u32 %v1269, 4294901760
    %1271 = vmatpush.msra.mxu0 %v1270
    %v1272 = vand.u32 %v1190, 4294901760
    %v1273 = vsub.f32 %v1190, %v1272
    %v1274 = vand.u32 %v1273, 4294901760
    %v1275 = vsub.f32 %v1273, %v1274
    %v1276 = vand.u32 %v1275, 4294901760
    %1277 = vmatpush.msra.mxu0 %v1276
    %v1278 = vand.u32 %v1189, 4294901760
    %v1279 = vsub.f32 %v1189, %v1278
    %v1280 = vand.u32 %v1279, 4294901760
    %v1281 = vsub.f32 %v1279, %v1280
    %v1282 = vand.u32 %v1281, 4294901760
    %1283 = vmatpush.msra.mxu0 %v1282
    %v1284 = vand.u32 %v1188, 4294901760
    %v1285 = vsub.f32 %v1188, %v1284
    %v1286 = vand.u32 %v1285, 4294901760
    %v1287 = vsub.f32 %v1285, %v1286
    %v1288 = vand.u32 %v1287, 4294901760
    %1289 = vmatpush.msra.mxu0 %v1288
    %v1290 = vand.u32 %v1187, 4294901760
    %v1291 = vsub.f32 %v1187, %v1290
    %v1292 = vand.u32 %v1291, 4294901760
    %v1293 = vsub.f32 %v1291, %v1292
    %v1294 = vand.u32 %v1293, 4294901760
    %1295 = vmatpush.msra.mxu0 %v1294
    %v1296 = vand.u32 %v1186, 4294901760
    %v1297 = vsub.f32 %v1186, %v1296
    %v1298 = vand.u32 %v1297, 4294901760
    %v1299 = vsub.f32 %v1297, %v1298
    %v1300 = vand.u32 %v1299, 4294901760
    %1301 = vmatpush.msra.mxu0 %v1300
    %v1302 = vand.u32 %v1185, 4294901760
    %v1303 = vsub.f32 %v1185, %v1302
    %v1304 = vand.u32 %v1303, 4294901760
    %v1305 = vsub.f32 %v1303, %v1304
    %v1306 = vand.u32 %v1305, 4294901760
    %1307 = vmatpush.msra.mxu0 %v1306
    %v1308 = vand.u32 %v1184, 4294901760
    %v1309 = vsub.f32 %v1184, %v1308
    %v1310 = vand.u32 %v1309, 4294901760
    %v1311 = vsub.f32 %v1309, %v1310
    %v1312 = vand.u32 %v1311, 4294901760
    %1313 = vmatpush.msra.mxu0 %v1312
    %v1314 = vand.u32 %v1183, 4294901760
    %v1315 = vsub.f32 %v1183, %v1314
    %v1316 = vand.u32 %v1315, 4294901760
    %v1317 = vsub.f32 %v1315, %v1316
    %v1318 = vand.u32 %v1317, 4294901760
    %1319 = vmatpush.msra.mxu0 %v1318
    %v1320 = vand.u32 %v1182, 4294901760
    %v1321 = vsub.f32 %v1182, %v1320
    %v1322 = vand.u32 %v1321, 4294901760
    %v1323 = vsub.f32 %v1321, %v1322
    %v1324 = vand.u32 %v1323, 4294901760
    %1325 = vmatpush.msra.mxu0 %v1324
    %v1326 = vand.u32 %v1181, 4294901760
    %v1327 = vsub.f32 %v1181, %v1326
    %v1328 = vand.u32 %v1327, 4294901760
    %v1329 = vsub.f32 %v1327, %v1328
    %v1330 = vand.u32 %v1329, 4294901760
    %1331 = vmatpush.msra.mxu0 %v1330
    %v1332 = vand.u32 %v1180, 4294901760
    %v1333 = vsub.f32 %v1180, %v1332
    %v1334 = vand.u32 %v1333, 4294901760
    %v1335 = vsub.f32 %v1333, %v1334
    %v1336 = vand.u32 %v1335, 4294901760
    %1337 = vmatpush.msra.mxu0 %v1336
    %v1338 = vand.u32 %v1178, 4294901760
    %1339 = vmatmul.f32.gmra.mxu0 %v1338
    %v1340 = vpop.f32.mrf.mxu0
    %v1341 = vadd.f32 %v1240, %v1340
    %1342 = vdwg.mxu0
    %v1343 = vand.u32 %v1195, 4294901760
    %v1344 = vsub.f32 %v1195, %v1343
    %1345 = vmatpush.msra.mxu0 %v1344
    %v1346 = vand.u32 %v1194, 4294901760
    %v1347 = vsub.f32 %v1194, %v1346
    %1348 = vmatpush.msra.mxu0 %v1347
    %v1349 = vand.u32 %v1193, 4294901760
    %v1350 = vsub.f32 %v1193, %v1349
    %1351 = vmatpush.msra.mxu0 %v1350
    %v1352 = vand.u32 %v1192, 4294901760
    %v1353 = vsub.f32 %v1192, %v1352
    %1354 = vmatpush.msra.mxu0 %v1353
    %v1355 = vand.u32 %v1191, 4294901760
    %v1356 = vsub.f32 %v1191, %v1355
    %1357 = vmatpush.msra.mxu0 %v1356
    %v1358 = vand.u32 %v1190, 4294901760
    %v1359 = vsub.f32 %v1190, %v1358
    %1360 = vmatpush.msra.mxu0 %v1359
    %v1361 = vand.u32 %v1189, 4294901760
    %v1362 = vsub.f32 %v1189, %v1361
    %1363 = vmatpush.msra.mxu0 %v1362
    %v1364 = vand.u32 %v1188, 4294901760
    %v1365 = vsub.f32 %v1188, %v1364
    %1366 = vmatpush.msra.mxu0 %v1365
    %v1367 = vand.u32 %v1187, 4294901760
    %v1368 = vsub.f32 %v1187, %v1367
    %1369 = vmatpush.msra.mxu0 %v1368
    %v1370 = vand.u32 %v1186, 4294901760
    %v1371 = vsub.f32 %v1186, %v1370
    %1372 = vmatpush.msra.mxu0 %v1371
    %v1373 = vand.u32 %v1185, 4294901760
    %v1374 = vsub.f32 %v1185, %v1373
    %1375 = vmatpush.msra.mxu0 %v1374
    %v1376 = vand.u32 %v1184, 4294901760
    %v1377 = vsub.f32 %v1184, %v1376
    %1378 = vmatpush.msra.mxu0 %v1377
    %v1379 = vand.u32 %v1183, 4294901760
    %v1380 = vsub.f32 %v1183, %v1379
    %1381 = vmatpush.msra.mxu0 %v1380
    %v1382 = vand.u32 %v1182, 4294901760
    %v1383 = vsub.f32 %v1182, %v1382
    %1384 = vmatpush.msra.mxu0 %v1383
    %v1385 = vand.u32 %v1181, 4294901760
    %v1386 = vsub.f32 %v1181, %v1385
    %1387 = vmatpush.msra.mxu0 %v1386
    %v1388 = vand.u32 %v1180, 4294901760
    %v1389 = vsub.f32 %v1180, %v1388
    %1390 = vmatpush.msra.mxu0 %v1389
    %v1391 = vand.u32 %v1178, 4294901760
    %v1392 = vsub.f32 %v1178, %v1391
    %1393 = vmatmul.f32.gmra.mxu0 %v1392
    %v1394 = vpop.f32.mrf.mxu0
    %v1395 = vadd.f32 %v1341, %v1394
    %1396 = vdwg.mxu0
    %v1397 = vand.u32 %v1195, 4294901760
    %1398 = vmatpush.msra.mxu0 %v1397
    %v1399 = vand.u32 %v1194, 4294901760
    %1400 = vmatpush.msra.mxu0 %v1399
    %v1401 = vand.u32 %v1193, 4294901760
    %1402 = vmatpush.msra.mxu0 %v1401
    %v1403 = vand.u32 %v1192, 4294901760
    %1404 = vmatpush.msra.mxu0 %v1403
    %v1405 = vand.u32 %v1191, 4294901760
    %1406 = vmatpush.msra.mxu0 %v1405
    %v1407 = vand.u32 %v1190, 4294901760
    %1408 = vmatpush.msra.mxu0 %v1407
    %v1409 = vand.u32 %v1189, 4294901760
    %1410 = vmatpush.msra.mxu0 %v1409
    %v1411 = vand.u32 %v1188, 4294901760
    %1412 = vmatpush.msra.mxu0 %v1411
    %v1413 = vand.u32 %v1187, 4294901760
    %1414 = vmatpush.msra.mxu0 %v1413
    %v1415 = vand.u32 %v1186, 4294901760
    %1416 = vmatpush.msra.mxu0 %v1415
    %v1417 = vand.u32 %v1185, 4294901760
    %1418 = vmatpush.msra.mxu0 %v1417
    %v1419 = vand.u32 %v1184, 4294901760
    %1420 = vmatpush.msra.mxu0 %v1419
    %v1421 = vand.u32 %v1183, 4294901760
    %1422 = vmatpush.msra.mxu0 %v1421
    %v1423 = vand.u32 %v1182, 4294901760
    %1424 = vmatpush.msra.mxu0 %v1423
    %v1425 = vand.u32 %v1181, 4294901760
    %1426 = vmatpush.msra.mxu0 %v1425
    %v1427 = vand.u32 %v1180, 4294901760
    %1428 = vmatpush.msra.mxu0 %v1427
    %v1429 = vand.u32 %v1178, 4294901760
    %v1430 = vsub.f32 %v1178, %v1429
    %v1431 = vand.u32 %v1430, 4294901760
    %1432 = vmatmul.f32.gmra.mxu0 %v1431
    %v1433 = vpop.f32.mrf.mxu0
    %v1434 = vadd.f32 %v1395, %v1433
    %1435 = vdwg.mxu0
    %v1436 = vand.u32 %v1195, 4294901760
    %v1437 = vsub.f32 %v1195, %v1436
    %v1438 = vand.u32 %v1437, 4294901760
    %1439 = vmatpush.msra.mxu0 %v1438
    %v1440 = vand.u32 %v1194, 4294901760
    %v1441 = vsub.f32 %v1194, %v1440
    %v1442 = vand.u32 %v1441, 4294901760
    %1443 = vmatpush.msra.mxu0 %v1442
    %v1444 = vand.u32 %v1193, 4294901760
    %v1445 = vsub.f32 %v1193, %v1444
    %v1446 = vand.u32 %v1445, 4294901760
    %1447 = vmatpush.msra.mxu0 %v1446
    %v1448 = vand.u32 %v1192, 4294901760
    %v1449 = vsub.f32 %v1192, %v1448
    %v1450 = vand.u32 %v1449, 4294901760
    %1451 = vmatpush.msra.mxu0 %v1450
    %v1452 = vand.u32 %v1191, 4294901760
    %v1453 = vsub.f32 %v1191, %v1452
    %v1454 = vand.u32 %v1453, 4294901760
    %1455 = vmatpush.msra.mxu0 %v1454
    %v1456 = vand.u32 %v1190, 4294901760
    %v1457 = vsub.f32 %v1190, %v1456
    %v1458 = vand.u32 %v1457, 4294901760
    %1459 = vmatpush.msra.mxu0 %v1458
    %v1460 = vand.u32 %v1189, 4294901760
    %v1461 = vsub.f32 %v1189, %v1460
    %v1462 = vand.u32 %v1461, 4294901760
    %1463 = vmatpush.msra.mxu0 %v1462
    %v1464 = vand.u32 %v1188, 4294901760
    %v1465 = vsub.f32 %v1188, %v1464
    %v1466 = vand.u32 %v1465, 4294901760
    %1467 = vmatpush.msra.mxu0 %v1466
    %v1468 = vand.u32 %v1187, 4294901760
    %v1469 = vsub.f32 %v1187, %v1468
    %v1470 = vand.u32 %v1469, 4294901760
    %1471 = vmatpush.msra.mxu0 %v1470
    %v1472 = vand.u32 %v1186, 4294901760
    %v1473 = vsub.f32 %v1186, %v1472
    %v1474 = vand.u32 %v1473, 4294901760
    %1475 = vmatpush.msra.mxu0 %v1474
    %v1476 = vand.u32 %v1185, 4294901760
    %v1477 = vsub.f32 %v1185, %v1476
    %v1478 = vand.u32 %v1477, 4294901760
    %1479 = vmatpush.msra.mxu0 %v1478
    %v1480 = vand.u32 %v1184, 4294901760
    %v1481 = vsub.f32 %v1184, %v1480
    %v1482 = vand.u32 %v1481, 4294901760
    %1483 = vmatpush.msra.mxu0 %v1482
    %v1484 = vand.u32 %v1183, 4294901760
    %v1485 = vsub.f32 %v1183, %v1484
    %v1486 = vand.u32 %v1485, 4294901760
    %1487 = vmatpush.msra.mxu0 %v1486
    %v1488 = vand.u32 %v1182, 4294901760
    %v1489 = vsub.f32 %v1182, %v1488
    %v1490 = vand.u32 %v1489, 4294901760
    %1491 = vmatpush.msra.mxu0 %v1490
    %v1492 = vand.u32 %v1181, 4294901760
    %v1493 = vsub.f32 %v1181, %v1492
    %v1494 = vand.u32 %v1493, 4294901760
    %1495 = vmatpush.msra.mxu0 %v1494
    %v1496 = vand.u32 %v1180, 4294901760
    %v1497 = vsub.f32 %v1180, %v1496
    %v1498 = vand.u32 %v1497, 4294901760
    %1499 = vmatpush.msra.mxu0 %v1498
    %v1500 = vand.u32 %v1178, 4294901760
    %1501 = vmatmul.f32.gmra.mxu0 %v1500
    %v1502 = vpop.f32.mrf.mxu0
    %v1503 = vadd.f32 %v1434, %v1502
    %1504 = vdwg.mxu0
    %v1505 = vand.u32 %v1195, 4294901760
    %1506 = vmatpush.msra.mxu0 %v1505
    %v1507 = vand.u32 %v1194, 4294901760
    %1508 = vmatpush.msra.mxu0 %v1507
    %v1509 = vand.u32 %v1193, 4294901760
    %1510 = vmatpush.msra.mxu0 %v1509
    %v1511 = vand.u32 %v1192, 4294901760
    %1512 = vmatpush.msra.mxu0 %v1511
    %v1513 = vand.u32 %v1191, 4294901760
    %1514 = vmatpush.msra.mxu0 %v1513
    %v1515 = vand.u32 %v1190, 4294901760
    %1516 = vmatpush.msra.mxu0 %v1515
    %v1517 = vand.u32 %v1189, 4294901760
    %1518 = vmatpush.msra.mxu0 %v1517
    %v1519 = vand.u32 %v1188, 4294901760
    %1520 = vmatpush.msra.mxu0 %v1519
    %v1521 = vand.u32 %v1187, 4294901760
    %1522 = vmatpush.msra.mxu0 %v1521
    %v1523 = vand.u32 %v1186, 4294901760
    %1524 = vmatpush.msra.mxu0 %v1523
    %v1525 = vand.u32 %v1185, 4294901760
    %1526 = vmatpush.msra.mxu0 %v1525
    %v1527 = vand.u32 %v1184, 4294901760
    %1528 = vmatpush.msra.mxu0 %v1527
    %v1529 = vand.u32 %v1183, 4294901760
    %1530 = vmatpush.msra.mxu0 %v1529
    %v1531 = vand.u32 %v1182, 4294901760
    %1532 = vmatpush.msra.mxu0 %v1531
    %v1533 = vand.u32 %v1181, 4294901760
    %1534 = vmatpush.msra.mxu0 %v1533
    %v1535 = vand.u32 %v1180, 4294901760
    %1536 = vmatpush.msra.mxu0 %v1535
    %v1537 = vand.u32 %v1178, 4294901760
    %1538 = vmatmul.f32.gmra.mxu0 %v1537
    %v1539 = vpop.f32.mrf.mxu0
    %v1540 = vadd.f32 %v1503, %v1539
    %1541 = vdwg.mxu0
    %v1542 = vmul.f32 %v1540, %v1540
    %v1543 = vmul.f32 %v1542, 0.035677407
    %v1544 = vadd.f32 %v1543, 0.7978846
    %v1545 = vmul.f32 %v1540, %v1544
    %v1546 = vmul.f32 %v1540, 0.5
    %v1547 = vtanh.pop %v1545
    %v1548 = vadd.f32 %v1547, 1.0
    %v1549 = vmul.f32 %v1546, %v1548
    %vm1550 = vcmask 130048
    %1551 = vst.msk [vmem:[#allocation9] sm:$0xff] %vm1550, %v1549
    // Predicated region
    $region26: #{ex_residual_connections.1} parent=1 // pred_check
      _
    $region27: #{ex_residual_connections.1} parent=1 // pred_check_branch
      %1553 = sbr.rel (0) target = $region29
    $region28: #{ex_residual_connections.1} parent=1 // pred_region
      %1555 = vsyncadd [#allocation5], 0
      %s1557 = sshll.u32 [#allocation9], 4
      %s1558 = int_to_ptr.vmem [resolvable:$true] %s1557
      %s1559 = sshll.u32 %s3, 4
      %s1560 = int_to_ptr.hbm [resolvable:$true] %s1559
      %1562 = dma.vmem_to_hbm [thread:$0]  %s1558, 128, %s1560, [#allocation5]
    $region29: #{ex_residual_connections.1} parent=1 // pred_fallthru
      _
    // Predicated region
    $region30: #{ex_residual_connections.1} parent=1 // pred_check
      _
    $region31: #{ex_residual_connections.1} parent=1 // pred_check_branch
      %1564 = sbr.rel (0) target = $region33
    $region32: #{ex_residual_connections.1} parent=1 // pred_region
      %1566 = dma.done [#allocation5], 128
    $region33: #{ex_residual_connections.1} parent=1 // pred_fallthru
      _
    %1567 = vsyncpa [#allocation4], 1
    %1568 = vsyncpa [#allocation7], 1
    %1569 = vsyncpa [#allocation5], 1

</llo_original>
